<compile_context>
chip_gen: v7x
topology: tpu7x:2x2x1
jax: 0.10.0
libtpu: 0.0.40
codegen_flags: <defaults>
</compile_context>

<pallas_src>
import functools

import jax
import jax.numpy as jnp
from jax.experimental import pallas as pl
from jax.experimental.pallas import tpu as pltpu


def _layernorm(v, w, b, eps=1e-5):
    mu = jnp.mean(v, axis=-1, keepdims=True)
    var = jnp.mean((v - mu) ** 2, axis=-1, keepdims=True)
    return (v - mu) * jax.lax.rsqrt(var + eps) * w + b


def transformer_stack_kernel(x_ref, rel_ref, wqkv_ref, wo_ref, w1_ref, w2_ref,
                             vecs_ref, b1_ref, o_ref, x_vmem, *, heads, dim_head):
    bf16 = jnp.bfloat16
    f32 = jnp.float32
    layer = pl.program_id(1)
    n = x_ref.shape[1]
    inner = heads * dim_head

    # layer 0: bring this batch row's activations into the resident VMEM scratch
    @pl.when(layer == 0)
    def _():
        x_vmem[...] = x_ref[0]

    x = x_vmem[...]                                    # (n, dim) f32

    vecs = vecs_ref[0]                                 # (8, dim) packed small params (f32)
    ln1_w, ln1_b = vecs[0:1], vecs[1:2]
    ln2_w, ln2_b = vecs[2:3], vecs[3:4]
    ln3_w, ln3_b = vecs[4:5], vecs[5:6]
    bo, b2 = vecs[6:7], vecs[7:8]

    # ---------------- attention (pre-norm) ----------------
    xn = _layernorm(x, ln1_w, ln1_b).astype(bf16)
    # fused QKV projection: one lane-dense (n, 3*inner) MXU matmul, single bf16 cast.
    qkv = jnp.dot(xn, wqkv_ref[0], preferred_element_type=f32).astype(bf16)
    qkv_nh = qkv.reshape(n, 3 * heads, dim_head)       # (n, 3h, dh)
    q_nh = qkv_nh[:, :heads, :]                        # (n, h, dh)  query-batched layout
    qkv_hn = pltpu.einshape("ngd->gnd", qkv_nh)        # (3h, n, dh) head-batched layout
    q3 = qkv_hn[:heads]
    k3 = qkv_hn[heads:2 * heads]
    v3 = qkv_hn[2 * heads:]

    # content scores: one head-batched MXU contraction (softmax scale pre-folded into Wq)
    dots = jnp.einsum("hid,hjd->hij", q3, k3, preferred_element_type=f32)
    # relative-position scores: query-batched bf16 MXU contraction against the rel table
    pos = jnp.einsum("ihd,ijd->ihj", q_nh, rel_ref[0], preferred_element_type=f32)
    logits = dots + pltpu.einshape("ihj->hij", pos)    # (heads, n, n) f32

    m = jnp.max(logits, axis=-1, keepdims=True)
    e = jnp.exp(logits - m)
    s = jnp.sum(e, axis=-1, keepdims=True)
    p_attn = (e * pl.reciprocal(s, approx=True)).astype(bf16)

    ctx = jnp.einsum("hij,hjd->hid", p_attn, v3, preferred_element_type=f32)   # (h, n, dh)
    # concat heads back to a lane-dense (n, inner) slab -> single K=inner output projection
    ctx_cat = pltpu.einshape("hnd->nhd", ctx.astype(bf16)).reshape(n, inner)
    x = x + jnp.dot(ctx_cat, wo_ref[0], preferred_element_type=f32) + bo

    # ---------------- feed-forward (pre-norm): Linear -> Swish -> Linear ----------------
    xn2 = _layernorm(x, ln2_w, ln2_b)
    h1 = jnp.dot(xn2.astype(bf16), w1_ref[0], preferred_element_type=f32) + b1_ref[0]
    h1 = h1 * jax.nn.sigmoid(h1)                       # Swish (f32 elementwise: v5e-safe)
    x = x + jnp.dot(h1.astype(bf16), w2_ref[0], preferred_element_type=f32) + b2

    # ---------------- post-norm; keep resident, emit only at the last layer ----------------
    y = _layernorm(x, ln3_w, ln3_b)
    x_vmem[...] = y

    @pl.when(layer == pl.num_programs(1) - 1)
    def _():
        o_ref[0] = y


def transformer_forward_pallas(x, blocks, *, heads, dim_head, max_pos_emb):
    b, n, dim = x.shape
    depth = len(blocks)
    inner = heads * dim_head
    hidden = blocks[0]["w1_t"].shape[1]
    scale = dim_head ** (-0.5)
    bf16 = jnp.bfloat16

    # --- cheap JAX-side prep (layout plumbing / dtype casts, not compute) ---
    wqkv = jnp.stack([jnp.concatenate([p["wq_t"] * scale, p["wk_t"], p["wv_t"]], axis=1)
                      for p in blocks]).astype(bf16)                  # (depth, dim, 3*inner)
    wo = jnp.stack([p["wo_t"] for p in blocks]).astype(bf16)          # (depth, inner, dim)
    w1 = jnp.stack([p["w1_t"] for p in blocks]).astype(bf16)          # (depth, dim, hidden)
    w2 = jnp.stack([p["w2_t"] for p in blocks]).astype(bf16)          # (depth, hidden, dim)
    vecs = jnp.stack([jnp.stack([p["ln1_w"], p["ln1_b"], p["ln2_w"], p["ln2_b"],
                                 p["ln3_w"], p["ln3_b"], p["bo"], p["b2"]])
                      for p in blocks])                               # (depth, 8, dim) f32
    b1 = jnp.stack([p["b1"].reshape(1, hidden) for p in blocks])      # (depth, 1, hidden) f32
    rel = jnp.stack([gather_rel_pos(p["rel_emb"], n, max_pos_emb)
                     for p in blocks]).astype(bf16)                   # (depth, n, n, dh) bf16

    kernel = functools.partial(transformer_stack_kernel, heads=heads, dim_head=dim_head)

    def wspec(*shape):  # per-layer weight: block = full array slab, indexed by depth
        zeros = (0,) * len(shape)
        return pl.BlockSpec((1,) + shape, lambda bb, dd, z=zeros: (dd,) + z)

    in_specs = [
        pl.BlockSpec((1, n, dim), lambda bb, dd: (bb, 0, 0)),  # x (one batch row per step)
        wspec(n, n, dim_head),                                 # gathered rel-pos table (bf16)
        wspec(dim, 3 * inner),                                 # fused [Wq*scale|Wk|Wv] (bf16)
        wspec(inner, dim),                                     # Wo (bf16)
        wspec(dim, hidden),                                    # W1 (bf16)
        wspec(hidden, dim),                                    # W2 (bf16)
        wspec(8, dim),                                         # packed LN w/b + bo + b2 (f32)
        wspec(1, hidden),                                      # b1 (f32)
    ]

    return pl.pallas_call(
        kernel,
        out_shape=jax.ShapeDtypeStruct((b, n, dim), jnp.float32),
        grid=(b, depth),
        in_specs=in_specs,
        out_specs=pl.BlockSpec((1, n, dim), lambda bb, dd: (bb, 0, 0)),
        scratch_shapes=[pltpu.VMEM((n, dim), jnp.float32)],
        compiler_params=pltpu.CompilerParams(
            dimension_semantics=("parallel", "arbitrary")),
    )(x, rel, wqkv, wo, w1, w2, vecs, b1)


def init_block_params(key, dim, heads, dim_head, ff_mult, max_pos_emb):
    inner = heads * dim_head
    hidden = dim * ff_mult
    ks = jax.random.split(key, 9)

    def lin_w(k, out_f, in_f):   # PyTorch default: U(-1/sqrt(fan_in), 1/sqrt(fan_in))
        bound = 1.0 / (in_f ** 0.5)
        return jax.random.uniform(k, (out_f, in_f), jnp.float32, -bound, bound)

    def lin_b(k, out_f, in_f):
        bound = 1.0 / (in_f ** 0.5)
        return jax.random.uniform(k, (out_f,), jnp.float32, -bound, bound)

    wq = lin_w(ks[0], inner, dim)
    wkv = lin_w(ks[1], 2 * inner, dim)
    wo = lin_w(ks[2], dim, inner)
    bo = lin_b(ks[3], dim, inner)
    w1 = lin_w(ks[4], hidden, dim)
    b1 = lin_b(ks[5], hidden, dim)
    w2 = lin_w(ks[6], dim, hidden)
    b2 = lin_b(ks[7], dim, hidden)
    rel_emb = jax.random.normal(ks[8], (2 * max_pos_emb + 1, dim_head), jnp.float32)

    wkv_t = wkv.T                           # (dim, 2*inner); chunk -> k first, v second
    return {
        "ln1_w": jnp.ones((dim,), jnp.float32), "ln1_b": jnp.zeros((dim,), jnp.float32),
        "wq_t": wq.T, "wk_t": wkv_t[:, :inner], "wv_t": wkv_t[:, inner:],
        "wo_t": wo.T, "bo": bo,
        "ln2_w": jnp.ones((dim,), jnp.float32), "ln2_b": jnp.zeros((dim,), jnp.float32),
        "w1_t": w1.T, "b1": b1, "w2_t": w2.T, "b2": b2,
        "ln3_w": jnp.ones((dim,), jnp.float32), "ln3_b": jnp.zeros((dim,), jnp.float32),
        "rel_emb": rel_emb,
    }


def gather_rel_pos(rel_emb, n, max_pos_emb):
    seq = jnp.arange(n)
    dist = seq[:, None] - seq[None, :]
    dist = jnp.clip(dist, -max_pos_emb, max_pos_emb) + max_pos_emb
    return jnp.take(rel_emb, dist, axis=0)        # (n, n, dim_head) -- plain-JAX glue


# ---------------- pure-JAX reference (mirrors the PyTorch forward) ----------------
def reference_forward(x, blocks, *, heads, dim_head, max_pos_emb,
                      matmul_dtype=jnp.float32):
    scale = dim_head ** (-0.5)
    b, n, dim = x.shape
    inner = heads * dim_head

    def mm(a, w):
        return jnp.dot(a.astype(matmul_dtype), w.astype(matmul_dtype),
                       preferred_element_type=jnp.float32)

    for p in blocks:
        rel = gather_rel_pos(p["rel_emb"], n, max_pos_emb)
        xn = _layernorm(x, p["ln1_w"], p["ln1_b"])
        q = mm(xn, p["wq_t"])
        k = mm(xn, p["wk_t"])
        v = mm(xn, p["wv_t"])
        qh = q.reshape(b, n, heads, dim_head).transpose(0, 2, 1, 3)
        kh = k.reshape(b, n, heads, dim_head).transpose(0, 2, 1, 3)
        vh = v.reshape(b, n, heads, dim_head).transpose(0, 2, 1, 3)
        dots = jnp.einsum("bhid,bhjd->bhij", qh.astype(matmul_dtype),
                          kh.astype(matmul_dtype),
                          preferred_element_type=jnp.float32) * scale
        pos = jnp.einsum("bhnd,nrd->bhnr", qh.astype(matmul_dtype),
                         rel.astype(matmul_dtype),
                         preferred_element_type=jnp.float32) * scale
        attn = jax.nn.softmax(dots + pos, axis=-1)
        out = jnp.einsum("bhij,bhjd->bhid", attn.astype(matmul_dtype),
                         vh.astype(matmul_dtype),
                         preferred_element_type=jnp.float32)
        out = out.transpose(0, 2, 1, 3).reshape(b, n, inner)
        x = x + mm(out, p["wo_t"]) + p["bo"]
        xn2 = _layernorm(x, p["ln2_w"], p["ln2_b"])
        h1 = mm(xn2, p["w1_t"]) + p["b1"]
        h1 = h1 * jax.nn.sigmoid(h1)
        x = x + mm(h1, p["w2_t"]) + p["b2"]
        x = _layernorm(x, p["ln3_w"], p["ln3_b"])
    return x


if __name__ == "__main__":
    # small shapes consistent with Transformer(dim=32, depth=2, dim_head=8, heads=4, ff_mult=4)
    batch, seq, dim = 2, 8, 32
    depth, heads, dim_head, ff_mult, max_pos_emb = 2, 4, 8, 4, 512

    root = jax.random.PRNGKey(0)
    kx, kp = jax.random.split(root)
    x = jax.random.normal(kx, (batch, seq, dim), jnp.float32)

    block_keys = jax.random.split(kp, depth)
    blocks = [init_block_params(block_keys[i], dim, heads, dim_head, ff_mult, max_pos_emb)
              for i in range(depth)]

    y = transformer_forward_pallas(x, blocks, heads=heads, dim_head=dim_head,
                                   max_pos_emb=max_pos_emb)
    y = jax.block_until_ready(y)
    assert y.shape == (batch, seq, dim)

    # check against a reference using the same bf16-operand / f32-accumulate policy
    y_ref_bf16 = reference_forward(x, blocks, heads=heads, dim_head=dim_head,
                                   max_pos_emb=max_pos_emb, matmul_dtype=jnp.bfloat16)
    assert jnp.allclose(y, y_ref_bf16, atol=5e-2, rtol=5e-2), "mismatch vs bf16-policy reference"

    # loose sanity check against the full-f32 PyTorch-equivalent math
    y_ref_f32 = reference_forward(x, blocks, heads=heads, dim_head=dim_head,
                                  max_pos_emb=max_pos_emb, matmul_dtype=jnp.float32)
    assert jnp.allclose(y, y_ref_f32, atol=2e-1, rtol=2e-1), "mismatch vs f32 reference"

    print("KERNEL_OK")
</pallas_src>

<mosaic_0001>
module attributes {stable_mosaic.version = 11 : i64} {
  func.func @transformer_stack_kernel(%arg0: i32, %arg1: i32, %arg2: memref<1x8x32xf32, #tpu.memory_space<vmem>>, %arg3: memref<1x8x8x8xbf16, #tpu.memory_space<vmem>>, %arg4: memref<1x32x96xbf16, #tpu.memory_space<vmem>>, %arg5: memref<1x32x32xbf16, #tpu.memory_space<vmem>>, %arg6: memref<1x32x128xbf16, #tpu.memory_space<vmem>>, %arg7: memref<1x128x32xbf16, #tpu.memory_space<vmem>>, %arg8: memref<1x8x32xf32, #tpu.memory_space<vmem>>, %arg9: memref<1x1x128xf32, #tpu.memory_space<vmem>>, %arg10: memref<1x8x32xf32, #tpu.memory_space<vmem>>, %arg11: memref<8x32xf32, #tpu.memory_space<vmem>>) attributes {dimension_semantics = [#tpu.dimension_semantics<parallel>, #tpu.dimension_semantics<arbitrary>], iteration_bounds = array<i64: 2, 2>, scalar_prefetch = 0 : i64, scratch_operands = 1 : i64, tpu.core_type = #tpu.core_type<tc>, window_params = [{transform_indices = @transform_0, window_bounds = array<i64: 1, 8, 32>}, {transform_indices = @transform_1, window_bounds = array<i64: 1, 8, 8, 8>}, {transform_indices = @transform_2, window_bounds = array<i64: 1, 32, 96>}, {transform_indices = @transform_3, window_bounds = array<i64: 1, 32, 32>}, {transform_indices = @transform_4, window_bounds = array<i64: 1, 32, 128>}, {transform_indices = @transform_5, window_bounds = array<i64: 1, 128, 32>}, {transform_indices = @transform_6, window_bounds = array<i64: 1, 8, 32>}, {transform_indices = @transform_7, window_bounds = array<i64: 1, 1, 128>}, {transform_indices = @transform_8, window_bounds = array<i64: 1, 8, 32>}]} {
    %c0_i32 = arith.constant 0 : i32
    %0 = arith.cmpi eq, %arg1, %c0_i32 : i32
    %1 = arith.extui %0 : i1 to i32
    %c0_i32_0 = arith.constant 0 : i32
    %2 = arith.cmpi ne, %1, %c0_i32_0 : i32
    scf.if %2 {
      %c0_51 = arith.constant 0 : index
      %c0_52 = arith.constant 0 : index
      %c0_53 = arith.constant 0 : index
      %143 = vector.load %arg2[%c0_51, %c0_52, %c0_53] : memref<1x8x32xf32, #tpu.memory_space<vmem>>, vector<1x8x32xf32>
      %144 = vector.shape_cast %143 : vector<1x8x32xf32> to vector<8x32xf32>
      %c0_54 = arith.constant 0 : index
      %c0_55 = arith.constant 0 : index
      %145 = vector.load %arg11[%c0_54, %c0_55] : memref<8x32xf32, #tpu.memory_space<vmem>>, vector<8x32xf32>
      tpu.vector_store %arg11[%c0_54, %c0_55], %144 {strides = array<i32>} : memref<8x32xf32, #tpu.memory_space<vmem>>, vector<8x32xf32>,
    } else {
    }
    %c0 = arith.constant 0 : index
    %c0_1 = arith.constant 0 : index
    %3 = vector.load %arg11[%c0, %c0_1] : memref<8x32xf32, #tpu.memory_space<vmem>>, vector<8x32xf32>
    %c0_2 = arith.constant 0 : index
    %c0_3 = arith.constant 0 : index
    %c0_4 = arith.constant 0 : index
    %4 = vector.load %arg8[%c0_2, %c0_3, %c0_4] : memref<1x8x32xf32, #tpu.memory_space<vmem>>, vector<1x8x32xf32>
    %5 = vector.shape_cast %4 : vector<1x8x32xf32> to vector<8x32xf32>
    %6 = vector.extract_strided_slice %5 {offsets = [0, 0], sizes = [1, 32], strides = [1, 1]} : vector<8x32xf32> to vector<1x32xf32>
    %7 = vector.extract_strided_slice %5 {offsets = [1, 0], sizes = [1, 32], strides = [1, 1]} : vector<8x32xf32> to vector<1x32xf32>
    %8 = vector.extract_strided_slice %5 {offsets = [2, 0], sizes = [1, 32], strides = [1, 1]} : vector<8x32xf32> to vector<1x32xf32>
    %9 = vector.extract_strided_slice %5 {offsets = [3, 0], sizes = [1, 32], strides = [1, 1]} : vector<8x32xf32> to vector<1x32xf32>
    %10 = vector.extract_strided_slice %5 {offsets = [4, 0], sizes = [1, 32], strides = [1, 1]} : vector<8x32xf32> to vector<1x32xf32>
    %11 = vector.extract_strided_slice %5 {offsets = [5, 0], sizes = [1, 32], strides = [1, 1]} : vector<8x32xf32> to vector<1x32xf32>
    %12 = vector.extract_strided_slice %5 {offsets = [6, 0], sizes = [1, 32], strides = [1, 1]} : vector<8x32xf32> to vector<1x32xf32>
    %13 = vector.extract_strided_slice %5 {offsets = [7, 0], sizes = [1, 32], strides = [1, 1]} : vector<8x32xf32> to vector<1x32xf32>
    %cst = arith.constant dense<0.000000e+00> : vector<8xf32>
    %14 = vector.multi_reduction <add>, %3, %cst [1] : vector<8x32xf32> to vector<8xf32>
    %15 = vector.shape_cast %14 : vector<8xf32> to vector<8x1xf32>
    %cst_5 = arith.constant 3.200000e+01 : f32
    %16 = vector.broadcast %cst_5 : f32 to vector<8x1xf32>
    %17 = arith.divf %15, %16 : vector<8x1xf32>
    %18 = vector.broadcast %17 : vector<8x1xf32> to vector<8x32xf32>
    %19 = arith.subf %3, %18 : vector<8x32xf32>
    %20 = arith.mulf %19, %19 : vector<8x32xf32>
    %cst_6 = arith.constant dense<0.000000e+00> : vector<8xf32>
    %21 = vector.multi_reduction <add>, %20, %cst_6 [1] : vector<8x32xf32> to vector<8xf32>
    %22 = vector.shape_cast %21 : vector<8xf32> to vector<8x1xf32>
    %cst_7 = arith.constant 3.200000e+01 : f32
    %23 = vector.broadcast %cst_7 : f32 to vector<8x1xf32>
    %24 = arith.divf %22, %23 : vector<8x1xf32>
    %25 = vector.broadcast %17 : vector<8x1xf32> to vector<8x32xf32>
    %26 = arith.subf %3, %25 : vector<8x32xf32>
    %cst_8 = arith.constant 9.99999974E-6 : f32
    %27 = vector.broadcast %cst_8 : f32 to vector<8x1xf32>
    %28 = arith.addf %24, %27 : vector<8x1xf32>
    %29 = math.rsqrt %28 : vector<8x1xf32>
    %30 = vector.broadcast %29 : vector<8x1xf32> to vector<8x32xf32>
    %31 = arith.mulf %26, %30 : vector<8x32xf32>
    %32 = vector.broadcast %6 : vector<1x32xf32> to vector<8x32xf32>
    %33 = arith.mulf %31, %32 : vector<8x32xf32>
    %34 = vector.broadcast %7 : vector<1x32xf32> to vector<8x32xf32>
    %35 = arith.addf %33, %34 : vector<8x32xf32>
    %36 = arith.truncf %35 : vector<8x32xf32> to vector<8x32xbf16>
    %c0_9 = arith.constant 0 : index
    %c0_10 = arith.constant 0 : index
    %c0_11 = arith.constant 0 : index
    %37 = vector.load %arg4[%c0_9, %c0_10, %c0_11] : memref<1x32x96xbf16, #tpu.memory_space<vmem>>, vector<1x32x96xbf16>
    %38 = vector.shape_cast %37 : vector<1x32x96xbf16> to vector<32x96xbf16>
    %cst_12 = arith.constant dense<0.000000e+00> : vector<8x96xf32>
    %39 = tpu.matmul %36, %38, %cst_12 {dimension_numbers = #tpu.dot_dimension_numbers<[1], [0], [0], [1], [0, 0, 1, 1], [], []>} : vector<8x32xbf16>, vector<32x96xbf16>, vector<8x96xf32> -> vector<8x96xf32>
    %40 = arith.truncf %39 : vector<8x96xf32> to vector<8x96xbf16>
    %41 = vector.shape_cast %40 : vector<8x96xbf16> to vector<8x12x8xbf16>
    %42 = vector.extract_strided_slice %41 {offsets = [0, 0, 0], sizes = [8, 4, 8], strides = [1, 1, 1]} : vector<8x12x8xbf16> to vector<8x4x8xbf16>
    %43 = tpu.transpose %41, [1, 0, 2] : vector<8x12x8xbf16> -> vector<12x8x8xbf16>
    %44 = vector.extract_strided_slice %43 {offsets = [0, 0, 0], sizes = [4, 8, 8], strides = [1, 1, 1]} : vector<12x8x8xbf16> to vector<4x8x8xbf16>
    %45 = vector.extract_strided_slice %43 {offsets = [4, 0, 0], sizes = [4, 8, 8], strides = [1, 1, 1]} : vector<12x8x8xbf16> to vector<4x8x8xbf16>
    %46 = vector.extract_strided_slice %43 {offsets = [8, 0, 0], sizes = [4, 8, 8], strides = [1, 1, 1]} : vector<12x8x8xbf16> to vector<4x8x8xbf16>
    "tpu.trace_start"() <{level = 10 : i32, message = "hid,hjd->hij"}> : () -> ()
    %cst_13 = arith.constant dense<0.000000e+00> : vector<4x8x8xf32>
    %47 = tpu.matmul %44, %45, %cst_13 {dimension_numbers = #tpu.dot_dimension_numbers<[2], [2], [1], [1], [0, 0, 0, 1, 1, 1], [0], [0]>} : vector<4x8x8xbf16>, vector<4x8x8xbf16>, vector<4x8x8xf32> -> vector<4x8x8xf32>
    "tpu.trace_stop"() : () -> ()
    %c0_14 = arith.constant 0 : index
    %c0_15 = arith.constant 0 : index
    %c0_16 = arith.constant 0 : index
    %c0_17 = arith.constant 0 : index
    %48 = vector.load %arg3[%c0_14, %c0_15, %c0_16, %c0_17] : memref<1x8x8x8xbf16, #tpu.memory_space<vmem>>, vector<1x8x8x8xbf16>
    %49 = vector.shape_cast %48 : vector<1x8x8x8xbf16> to vector<8x8x8xbf16>
    "tpu.trace_start"() <{level = 10 : i32, message = "ihd,ijd->ihj"}> : () -> ()
    %cst_18 = arith.constant dense<0.000000e+00> : vector<8x4x8xf32>
    %50 = tpu.matmul %42, %49, %cst_18 {dimension_numbers = #tpu.dot_dimension_numbers<[2], [2], [1], [1], [0, 0, 0, 1, 1, 1], [0], [0]>} : vector<8x4x8xbf16>, vector<8x8x8xbf16>, vector<8x4x8xf32> -> vector<8x4x8xf32>
    "tpu.trace_stop"() : () -> ()
    %51 = tpu.transpose %50, [1, 0, 2] : vector<8x4x8xf32> -> vector<4x8x8xf32>
    %52 = arith.addf %47, %51 : vector<4x8x8xf32>
    %cst_19 = arith.constant dense<0xFF800000> : vector<4x8xf32>
    %53 = vector.multi_reduction <maximumf>, %52, %cst_19 [2] : vector<4x8x8xf32> to vector<4x8xf32>
    %54 = vector.shape_cast %53 : vector<4x8xf32> to vector<4x8x1xf32>
    %55 = vector.broadcast %54 : vector<4x8x1xf32> to vector<4x8x8xf32>
    %56 = arith.subf %52, %55 : vector<4x8x8xf32>
    %57 = math.exp %56 : vector<4x8x8xf32>
    %cst_20 = arith.constant dense<0.000000e+00> : vector<4x8xf32>
    %58 = vector.multi_reduction <add>, %57, %cst_20 [2] : vector<4x8x8xf32> to vector<4x8xf32>
    %59 = vector.shape_cast %58 : vector<4x8xf32> to vector<4x8x1xf32>
    %60 = tpu.reciprocal %59 {approx = true} : vector<4x8x1xf32> -> vector<4x8x1xf32>
    %61 = vector.broadcast %60 : vector<4x8x1xf32> to vector<4x8x8xf32>
    %62 = arith.mulf %57, %61 : vector<4x8x8xf32>
    %63 = arith.truncf %62 : vector<4x8x8xf32> to vector<4x8x8xbf16>
    "tpu.trace_start"() <{level = 10 : i32, message = "hij,hjd->hid"}> : () -> ()
    %cst_21 = arith.constant dense<0.000000e+00> : vector<4x8x8xf32>
    %64 = tpu.matmul %63, %46, %cst_21 {dimension_numbers = #tpu.dot_dimension_numbers<[2], [1], [1], [2], [0, 0, 0, 1, 1, 2], [0], [0]>} : vector<4x8x8xbf16>, vector<4x8x8xbf16>, vector<4x8x8xf32> -> vector<4x8x8xf32>
    "tpu.trace_stop"() : () -> ()
    %65 = arith.truncf %64 : vector<4x8x8xf32> to vector<4x8x8xbf16>
    %66 = tpu.transpose %65, [1, 0, 2] : vector<4x8x8xbf16> -> vector<8x4x8xbf16>
    %67 = vector.shape_cast %66 : vector<8x4x8xbf16> to vector<8x32xbf16>
    %c0_22 = arith.constant 0 : index
    %c0_23 = arith.constant 0 : index
    %c0_24 = arith.constant 0 : index
    %68 = vector.load %arg5[%c0_22, %c0_23, %c0_24] : memref<1x32x32xbf16, #tpu.memory_space<vmem>>, vector<1x32x32xbf16>
    %69 = vector.shape_cast %68 : vector<1x32x32xbf16> to vector<32x32xbf16>
    %cst_25 = arith.constant dense<0.000000e+00> : vector<8x32xf32>
    %70 = tpu.matmul %67, %69, %cst_25 {dimension_numbers = #tpu.dot_dimension_numbers<[1], [0], [0], [1], [0, 0, 1, 1], [], []>} : vector<8x32xbf16>, vector<32x32xbf16>, vector<8x32xf32> -> vector<8x32xf32>
    %71 = arith.addf %3, %70 : vector<8x32xf32>
    %72 = vector.broadcast %12 : vector<1x32xf32> to vector<8x32xf32>
    %73 = arith.addf %71, %72 : vector<8x32xf32>
    %cst_26 = arith.constant dense<0.000000e+00> : vector<8xf32>
    %74 = vector.multi_reduction <add>, %73, %cst_26 [1] : vector<8x32xf32> to vector<8xf32>
    %75 = vector.shape_cast %74 : vector<8xf32> to vector<8x1xf32>
    %cst_27 = arith.constant 3.200000e+01 : f32
    %76 = vector.broadcast %cst_27 : f32 to vector<8x1xf32>
    %77 = arith.divf %75, %76 : vector<8x1xf32>
    %78 = vector.broadcast %77 : vector<8x1xf32> to vector<8x32xf32>
    %79 = arith.subf %73, %78 : vector<8x32xf32>
    %80 = arith.mulf %79, %79 : vector<8x32xf32>
    %cst_28 = arith.constant dense<0.000000e+00> : vector<8xf32>
    %81 = vector.multi_reduction <add>, %80, %cst_28 [1] : vector<8x32xf32> to vector<8xf32>
    %82 = vector.shape_cast %81 : vector<8xf32> to vector<8x1xf32>
    %cst_29 = arith.constant 3.200000e+01 : f32
    %83 = vector.broadcast %cst_29 : f32 to vector<8x1xf32>
    %84 = arith.divf %82, %83 : vector<8x1xf32>
    %85 = vector.broadcast %77 : vector<8x1xf32> to vector<8x32xf32>
    %86 = arith.subf %73, %85 : vector<8x32xf32>
    %cst_30 = arith.constant 9.99999974E-6 : f32
    %87 = vector.broadcast %cst_30 : f32 to vector<8x1xf32>
    %88 = arith.addf %84, %87 : vector<8x1xf32>
    %89 = math.rsqrt %88 : vector<8x1xf32>
    %90 = vector.broadcast %89 : vector<8x1xf32> to vector<8x32xf32>
    %91 = arith.mulf %86, %90 : vector<8x32xf32>
    %92 = vector.broadcast %8 : vector<1x32xf32> to vector<8x32xf32>
    %93 = arith.mulf %91, %92 : vector<8x32xf32>
    %94 = vector.broadcast %9 : vector<1x32xf32> to vector<8x32xf32>
    %95 = arith.addf %93, %94 : vector<8x32xf32>
    %96 = arith.truncf %95 : vector<8x32xf32> to vector<8x32xbf16>
    %c0_31 = arith.constant 0 : index
    %c0_32 = arith.constant 0 : index
    %c0_33 = arith.constant 0 : index
    %97 = vector.load %arg6[%c0_31, %c0_32, %c0_33] : memref<1x32x128xbf16, #tpu.memory_space<vmem>>, vector<1x32x128xbf16>
    %98 = vector.shape_cast %97 : vector<1x32x128xbf16> to vector<32x128xbf16>
    %cst_34 = arith.constant dense<0.000000e+00> : vector<8x128xf32>
    %99 = tpu.matmul %96, %98, %cst_34 {dimension_numbers = #tpu.dot_dimension_numbers<[1], [0], [0], [1], [0, 0, 1, 1], [], []>} : vector<8x32xbf16>, vector<32x128xbf16>, vector<8x128xf32> -> vector<8x128xf32>
    %c0_35 = arith.constant 0 : index
    %c0_36 = arith.constant 0 : index
    %c0_37 = arith.constant 0 : index
    %100 = vector.load %arg9[%c0_35, %c0_36, %c0_37] : memref<1x1x128xf32, #tpu.memory_space<vmem>>, vector<1x1x128xf32>
    %101 = vector.shape_cast %100 : vector<1x1x128xf32> to vector<1x128xf32>
    %102 = vector.broadcast %101 : vector<1x128xf32> to vector<8x128xf32>
    %103 = arith.addf %99, %102 : vector<8x128xf32>
    %104 = arith.negf %103 : vector<8x128xf32>
    %105 = math.exp %104 : vector<8x128xf32>
    %cst_38 = arith.constant 1.000000e+00 : f32
    %106 = vector.broadcast %cst_38 : f32 to vector<8x128xf32>
    %107 = arith.addf %106, %105 : vector<8x128xf32>
    %108 = arith.divf %106, %107 : vector<8x128xf32>
    %109 = arith.mulf %103, %108 : vector<8x128xf32>
    %110 = arith.truncf %109 : vector<8x128xf32> to vector<8x128xbf16>
    %c0_39 = arith.constant 0 : index
    %c0_40 = arith.constant 0 : index
    %c0_41 = arith.constant 0 : index
    %111 = vector.load %arg7[%c0_39, %c0_40, %c0_41] : memref<1x128x32xbf16, #tpu.memory_space<vmem>>, vector<1x128x32xbf16>
    %112 = vector.shape_cast %111 : vector<1x128x32xbf16> to vector<128x32xbf16>
    %cst_42 = arith.constant dense<0.000000e+00> : vector<8x32xf32>
    %113 = tpu.matmul %110, %112, %cst_42 {dimension_numbers = #tpu.dot_dimension_numbers<[1], [0], [0], [1], [0, 0, 1, 1], [], []>} : vector<8x128xbf16>, vector<128x32xbf16>, vector<8x32xf32> -> vector<8x32xf32>
    %114 = arith.addf %73, %113 : vector<8x32xf32>
    %115 = vector.broadcast %13 : vector<1x32xf32> to vector<8x32xf32>
    %116 = arith.addf %114, %115 : vector<8x32xf32>
    %cst_43 = arith.constant dense<0.000000e+00> : vector<8xf32>
    %117 = vector.multi_reduction <add>, %116, %cst_43 [1] : vector<8x32xf32> to vector<8xf32>
    %118 = vector.shape_cast %117 : vector<8xf32> to vector<8x1xf32>
    %cst_44 = arith.constant 3.200000e+01 : f32
    %119 = vector.broadcast %cst_44 : f32 to vector<8x1xf32>
    %120 = arith.divf %118, %119 : vector<8x1xf32>
    %121 = vector.broadcast %120 : vector<8x1xf32> to vector<8x32xf32>
    %122 = arith.subf %116, %121 : vector<8x32xf32>
    %123 = arith.mulf %122, %122 : vector<8x32xf32>
    %cst_45 = arith.constant dense<0.000000e+00> : vector<8xf32>
    %124 = vector.multi_reduction <add>, %123, %cst_45 [1] : vector<8x32xf32> to vector<8xf32>
    %125 = vector.shape_cast %124 : vector<8xf32> to vector<8x1xf32>
    %cst_46 = arith.constant 3.200000e+01 : f32
    %126 = vector.broadcast %cst_46 : f32 to vector<8x1xf32>
    %127 = arith.divf %125, %126 : vector<8x1xf32>
    %128 = vector.broadcast %120 : vector<8x1xf32> to vector<8x32xf32>
    %129 = arith.subf %116, %128 : vector<8x32xf32>
    %cst_47 = arith.constant 9.99999974E-6 : f32
    %130 = vector.broadcast %cst_47 : f32 to vector<8x1xf32>
    %131 = arith.addf %127, %130 : vector<8x1xf32>
    %132 = math.rsqrt %131 : vector<8x1xf32>
    %133 = vector.broadcast %132 : vector<8x1xf32> to vector<8x32xf32>
    %134 = arith.mulf %129, %133 : vector<8x32xf32>
    %135 = vector.broadcast %10 : vector<1x32xf32> to vector<8x32xf32>
    %136 = arith.mulf %134, %135 : vector<8x32xf32>
    %137 = vector.broadcast %11 : vector<1x32xf32> to vector<8x32xf32>
    %138 = arith.addf %136, %137 : vector<8x32xf32>
    %c0_48 = arith.constant 0 : index
    %c0_49 = arith.constant 0 : index
    %139 = vector.load %arg11[%c0_48, %c0_49] : memref<8x32xf32, #tpu.memory_space<vmem>>, vector<8x32xf32>
    tpu.vector_store %arg11[%c0_48, %c0_49], %138 {strides = array<i32>} : memref<8x32xf32, #tpu.memory_space<vmem>>, vector<8x32xf32>,
    %c1_i32 = arith.constant 1 : i32
    %140 = arith.cmpi eq, %arg1, %c1_i32 : i32
    %141 = arith.extui %140 : i1 to i32
    %c0_i32_50 = arith.constant 0 : i32
    %142 = arith.cmpi ne, %141, %c0_i32_50 : i32
    scf.if %142 {
      %c0_51 = arith.constant 0 : index
      %c0_52 = arith.constant 0 : index
      %c0_53 = arith.constant 0 : index
      %143 = vector.load %arg10[%c0_51, %c0_52, %c0_53] : memref<1x8x32xf32, #tpu.memory_space<vmem>>, vector<1x8x32xf32>
      %144 = vector.shape_cast %143 : vector<1x8x32xf32> to vector<8x32xf32>
      %145 = vector.shape_cast %138 : vector<8x32xf32> to vector<1x8x32xf32>
      tpu.vector_store %arg10[%c0_51, %c0_52, %c0_53], %145 {strides = array<i32>} : memref<1x8x32xf32, #tpu.memory_space<vmem>>, vector<1x8x32xf32>,
    } else {
    }
    return
  }
  func.func @transform_0(%arg0: i32, %arg1: i32) -> (i32, i32, i32) {
    %c0_i32 = arith.constant 0 : i32
    %c0_i32_0 = arith.constant 0 : i32
    %c0_i32_1 = arith.constant 0 : i32
    return %arg0, %c0_i32, %c0_i32_0 : i32, i32, i32
  }
  func.func @transform_1(%arg0: i32, %arg1: i32) -> (i32, i32, i32, i32) {
    %c0_i32 = arith.constant 0 : i32
    %c0_i32_0 = arith.constant 0 : i32
    %c0_i32_1 = arith.constant 0 : i32
    %c0_i32_2 = arith.constant 0 : i32
    return %arg1, %c0_i32, %c0_i32_0, %c0_i32_1 : i32, i32, i32, i32
  }
  func.func @transform_2(%arg0: i32, %arg1: i32) -> (i32, i32, i32) {
    %c0_i32 = arith.constant 0 : i32
    %c0_i32_0 = arith.constant 0 : i32
    %c0_i32_1 = arith.constant 0 : i32
    return %arg1, %c0_i32, %c0_i32_0 : i32, i32, i32
  }
  func.func @transform_3(%arg0: i32, %arg1: i32) -> (i32, i32, i32) {
    %c0_i32 = arith.constant 0 : i32
    %c0_i32_0 = arith.constant 0 : i32
    %c0_i32_1 = arith.constant 0 : i32
    return %arg1, %c0_i32, %c0_i32_0 : i32, i32, i32
  }
  func.func @transform_4(%arg0: i32, %arg1: i32) -> (i32, i32, i32) {
    %c0_i32 = arith.constant 0 : i32
    %c0_i32_0 = arith.constant 0 : i32
    %c0_i32_1 = arith.constant 0 : i32
    return %arg1, %c0_i32, %c0_i32_0 : i32, i32, i32
  }
  func.func @transform_5(%arg0: i32, %arg1: i32) -> (i32, i32, i32) {
    %c0_i32 = arith.constant 0 : i32
    %c0_i32_0 = arith.constant 0 : i32
    %c0_i32_1 = arith.constant 0 : i32
    return %arg1, %c0_i32, %c0_i32_0 : i32, i32, i32
  }
  func.func @transform_6(%arg0: i32, %arg1: i32) -> (i32, i32, i32) {
    %c0_i32 = arith.constant 0 : i32
    %c0_i32_0 = arith.constant 0 : i32
    %c0_i32_1 = arith.constant 0 : i32
    return %arg1, %c0_i32, %c0_i32_0 : i32, i32, i32
  }
  func.func @transform_7(%arg0: i32, %arg1: i32) -> (i32, i32, i32) {
    %c0_i32 = arith.constant 0 : i32
    %c0_i32_0 = arith.constant 0 : i32
    %c0_i32_1 = arith.constant 0 : i32
    return %arg1, %c0_i32, %c0_i32_0 : i32, i32, i32
  }
  func.func @transform_8(%arg0: i32, %arg1: i32) -> (i32, i32, i32) {
    %c0_i32 = arith.constant 0 : i32
    %c0_i32_0 = arith.constant 0 : i32
    %c0_i32_1 = arith.constant 0 : i32
    return %arg0, %c0_i32, %c0_i32_0 : i32, i32, i32
  }
}

</mosaic_0001>

<llo_original>
// kernel: tpu_custom_call.1
$region0: #{tpu_custom_call.1}
  #allocation0 [shape = 'u32[]', space=smem, size = 0x4, offset = 0x4, fixed_abs, tag = 'smem constant byte address 0x4 - core index']
  #allocation1 [shape = 'u32[144,128]{1,0:T(1,128)}', space=vmem, size = 0x12000, scoped, tag = 'internal scratch']
  #allocation2 [shape = 'f32[8,32]{1,0:T(8,128)}', space=vmem, size = 0x1000, scoped, tag = 'scratch operand']
  %s0 = inlined_call_operand.hbm [shape: f32[2,8,32], index: 0, kind: input, shape index: {}]
  %s1 = inlined_call_operand.vmem [shape: bf16[2,8,8,8], index: 1, kind: input, shape index: {}]
  %s2 = inlined_call_operand.vmem [shape: bf16[2,32,96], index: 2, kind: input, shape index: {}]
  %s3 = inlined_call_operand.vmem [shape: bf16[2,32,32], index: 3, kind: input, shape index: {}]
  %s4 = inlined_call_operand.vmem [shape: bf16[2,32,128], index: 4, kind: input, shape index: {}]
  %s5 = inlined_call_operand.vmem [shape: bf16[2,128,32], index: 5, kind: input, shape index: {}]
  %s6 = inlined_call_operand.vmem [shape: f32[2,8,32], index: 6, kind: input, shape index: {}]
  %s7 = inlined_call_operand.vmem [shape: f32[2,1,128], index: 7, kind: input, shape index: {}]
  %s8 = inlined_call_operand.hbm [shape: f32[2,8,32], index: 8, kind: output, shape index: {}]
  %s9 = sld [smem:[#allocation0]]
  $region77: #{tpu_custom_call.1} parent=0
    _
  %s11 = ssub.s32 1, %s9
  %s12 = scalar_select 0, %s11, %s9
  $region1: #{tpu_custom_call.1} parent=0
    #allocation3 [shape = 'u8[8192]{0}', space=vmem, size = 0x2000, scoped, tag = 'input window, operand 0']
    #allocation4 [shape = 's32[2]{0}', space=sflag, size = 0x8, scoped, tag = 'scoped memory for tpu_custom_call.1']
    #allocation5 [shape = 's32[2]{0}', space=sflag, size = 0x8, scoped, tag = 'scoped memory for tpu_custom_call.1']
    #allocation6 [shape = 'u8[8192]{0}', space=vmem, size = 0x2000, scoped, tag = 'output window, operand 0']
    %13 = vsyncpa [#allocation4], 0
    %s14 = scalar_lea.sflag [#allocation4], 1
    %15 = vsyncpa %s14, 0
    %16 = vsyncpa [#allocation5], 0
    %s17 = scalar_lea.sflag [#allocation5], 1
    %18 = vsyncpa %s17, 0
    loop: start=0, step=1, limit=6
    $region2: #{tpu_custom_call.1} parent=1 // loop_pre_header
      _
    $region3: #{tpu_custom_call.1} parent=1 // loop_header
      %s20 = sphi 0, %s24
      %p21 = scmp.ge.s32.totalorder %s20, 6
      %s27 = sphi 0, %s39
      %s28 = sphi 0, %s35
      %s29 = sphi 0, %s27
      %s30 = sphi 0, %s28
      %s31 = sphi 0, %s29
      %s32 = sphi 0, %s30
      %s42 = sphi 0, %s44
      %s45 = sphi 0, %s42
      %s46 = sphi 0, %s45
      %s62 = sphi 0, %s46
      %s68 = sphi 0, %s70
      %s71 = sphi 0, %s68
      %s72 = sphi 0, %s71
      %s88 = sphi 0, %s72
      %s94 = sphi 0, %s96
      %s97 = sphi 0, %s94
      %s98 = sphi 0, %s97
      %s114 = sphi 0, %s98
      %s120 = sphi 0, %s122
      %s123 = sphi 0, %s120
      %s124 = sphi 0, %s123
      %s140 = sphi 0, %s124
      %s146 = sphi 0, %s148
      %s149 = sphi 0, %s146
      %s150 = sphi 0, %s149
      %s166 = sphi 0, %s150
      %s172 = sphi 0, %s174
      %s175 = sphi 0, %s172
      %s176 = sphi 0, %s175
      %s192 = sphi 0, %s176
      %s198 = sphi 0, %s200
      %s201 = sphi 0, %s198
      %s202 = sphi 0, %s201
      %s218 = sphi 0, %s202
      %s224 = sphi 0, %s226
      %s227 = sphi 0, %s224
      %s228 = sphi 0, %s227
      %s244 = sphi 0, %s228
      %s250 = sphi 0, %s252
      %s253 = sphi 0, %s250
      %s254 = sphi 0, %s253
      %s270 = sphi 0, %s254
    $region4: #{tpu_custom_call.1} parent=1 // loop_header_branch
      %23 = sbr.rel (%p21) target = $region8
    $region5: #{tpu_custom_call.1} parent=1 // loop_body
      %s25 = ssub.s32 %s20, 1
      %s26 = ssub.s32 %s20, 2
      %s33 = sadd.s32 1, %s28
      %p34 = scmp.ge.s32.totalorder %s33, 2
      %s35 = scalar_select %p34, 0, %s33
      %s36 = sadd.s32 1, %s27
      %s37 = scalar_select %p34, %s36, %s27
      %p38 = scmp.ge.s32.totalorder %s37, 2
      %s39 = scalar_select %p38, 0, %s37
      %s40 = ssub.s32 %s27, %s39
      %p41 = scmp.eq.s32.totalorder %s40, 0
      %s43 = sadd.s32 %s42, 1
      %s44 = scalar_select %p41, %s42, %s43
      %p47 = pneg %p41
      %p48 = scmp.eq.s32.totalorder %s20, 3
      %p49 = por %p47, %p48
      %p50 = scmp.ne.s32.totalorder %s42, %s45
      %p51 = scmp.eq.s32.totalorder %s20, 0
      %p52 = por %p50, %p51
      %p53 = scmp.ne.s32.totalorder %s42, %s45
      %p54 = scmp.eq.s32.totalorder %s25, 3
      %p55 = por %p53, %p54
      %p56 = scmp.ne.s32.totalorder %s45, %s46
      %p57 = scmp.eq.s32.totalorder %s25, 0
      %p58 = por %p56, %p57
      %p59 = scmp.ne.s32.totalorder %s45, %s46
      %p60 = scmp.eq.s32.totalorder %s26, 3
      %p61 = por %p59, %p60
      %p63 = scmp.ne.s32.totalorder %s46, %s62
      %p64 = scmp.eq.s32.totalorder %s26, 0
      %p65 = por %p63, %p64
      %s66 = ssub.s32 %s28, %s35
      %p67 = scmp.eq.s32.totalorder %s66, 0
      %s69 = sadd.s32 %s68, 1
      %s70 = scalar_select %p67, %s68, %s69
      %p73 = pneg %p67
      %p74 = scmp.eq.s32.totalorder %s20, 3
      %p75 = por %p73, %p74
      %p76 = scmp.ne.s32.totalorder %s68, %s71
      %p77 = scmp.eq.s32.totalorder %s20, 0
      %p78 = por %p76, %p77
      %p79 = scmp.ne.s32.totalorder %s68, %s71
      %p80 = scmp.eq.s32.totalorder %s25, 3
      %p81 = por %p79, %p80
      %p82 = scmp.ne.s32.totalorder %s71, %s72
      %p83 = scmp.eq.s32.totalorder %s25, 0
      %p84 = por %p82, %p83
      %p85 = scmp.ne.s32.totalorder %s71, %s72
      %p86 = scmp.eq.s32.totalorder %s26, 3
      %p87 = por %p85, %p86
      %p89 = scmp.ne.s32.totalorder %s72, %s88
      %p90 = scmp.eq.s32.totalorder %s26, 0
      %p91 = por %p89, %p90
      %s92 = ssub.s32 %s28, %s35
      %p93 = scmp.eq.s32.totalorder %s92, 0
      %s95 = sadd.s32 %s94, 1
      %s96 = scalar_select %p93, %s94, %s95
      %p99 = pneg %p93
      %p100 = scmp.eq.s32.totalorder %s20, 3
      %p101 = por %p99, %p100
      %p102 = scmp.ne.s32.totalorder %s94, %s97
      %p103 = scmp.eq.s32.totalorder %s20, 0
      %p104 = por %p102, %p103
      %p105 = scmp.ne.s32.totalorder %s94, %s97
      %p106 = scmp.eq.s32.totalorder %s25, 3
      %p107 = por %p105, %p106
      %p108 = scmp.ne.s32.totalorder %s97, %s98
      %p109 = scmp.eq.s32.totalorder %s25, 0
      %p110 = por %p108, %p109
      %p111 = scmp.ne.s32.totalorder %s97, %s98
      %p112 = scmp.eq.s32.totalorder %s26, 3
      %p113 = por %p111, %p112
      %p115 = scmp.ne.s32.totalorder %s98, %s114
      %p116 = scmp.eq.s32.totalorder %s26, 0
      %p117 = por %p115, %p116
      %s118 = ssub.s32 %s28, %s35
      %p119 = scmp.eq.s32.totalorder %s118, 0
      %s121 = sadd.s32 %s120, 1
      %s122 = scalar_select %p119, %s120, %s121
      %p125 = pneg %p119
      %p126 = scmp.eq.s32.totalorder %s20, 3
      %p127 = por %p125, %p126
      %p128 = scmp.ne.s32.totalorder %s120, %s123
      %p129 = scmp.eq.s32.totalorder %s20, 0
      %p130 = por %p128, %p129
      %p131 = scmp.ne.s32.totalorder %s120, %s123
      %p132 = scmp.eq.s32.totalorder %s25, 3
      %p133 = por %p131, %p132
      %p134 = scmp.ne.s32.totalorder %s123, %s124
      %p135 = scmp.eq.s32.totalorder %s25, 0
      %p136 = por %p134, %p135
      %p137 = scmp.ne.s32.totalorder %s123, %s124
      %p138 = scmp.eq.s32.totalorder %s26, 3
      %p139 = por %p137, %p138
      %p141 = scmp.ne.s32.totalorder %s124, %s140
      %p142 = scmp.eq.s32.totalorder %s26, 0
      %p143 = por %p141, %p142
      %s144 = ssub.s32 %s28, %s35
      %p145 = scmp.eq.s32.totalorder %s144, 0
      %s147 = sadd.s32 %s146, 1
      %s148 = scalar_select %p145, %s146, %s147
      %p151 = pneg %p145
      %p152 = scmp.eq.s32.totalorder %s20, 3
      %p153 = por %p151, %p152
      %p154 = scmp.ne.s32.totalorder %s146, %s149
      %p155 = scmp.eq.s32.totalorder %s20, 0
      %p156 = por %p154, %p155
      %p157 = scmp.ne.s32.totalorder %s146, %s149
      %p158 = scmp.eq.s32.totalorder %s25, 3
      %p159 = por %p157, %p158
      %p160 = scmp.ne.s32.totalorder %s149, %s150
      %p161 = scmp.eq.s32.totalorder %s25, 0
      %p162 = por %p160, %p161
      %p163 = scmp.ne.s32.totalorder %s149, %s150
      %p164 = scmp.eq.s32.totalorder %s26, 3
      %p165 = por %p163, %p164
      %p167 = scmp.ne.s32.totalorder %s150, %s166
      %p168 = scmp.eq.s32.totalorder %s26, 0
      %p169 = por %p167, %p168
      %s170 = ssub.s32 %s28, %s35
      %p171 = scmp.eq.s32.totalorder %s170, 0
      %s173 = sadd.s32 %s172, 1
      %s174 = scalar_select %p171, %s172, %s173
      %p177 = pneg %p171
      %p178 = scmp.eq.s32.totalorder %s20, 3
      %p179 = por %p177, %p178
      %p180 = scmp.ne.s32.totalorder %s172, %s175
      %p181 = scmp.eq.s32.totalorder %s20, 0
      %p182 = por %p180, %p181
      %p183 = scmp.ne.s32.totalorder %s172, %s175
      %p184 = scmp.eq.s32.totalorder %s25, 3
      %p185 = por %p183, %p184
      %p186 = scmp.ne.s32.totalorder %s175, %s176
      %p187 = scmp.eq.s32.totalorder %s25, 0
      %p188 = por %p186, %p187
      %p189 = scmp.ne.s32.totalorder %s175, %s176
      %p190 = scmp.eq.s32.totalorder %s26, 3
      %p191 = por %p189, %p190
      %p193 = scmp.ne.s32.totalorder %s176, %s192
      %p194 = scmp.eq.s32.totalorder %s26, 0
      %p195 = por %p193, %p194
      %s196 = ssub.s32 %s28, %s35
      %p197 = scmp.eq.s32.totalorder %s196, 0
      %s199 = sadd.s32 %s198, 1
      %s200 = scalar_select %p197, %s198, %s199
      %p203 = pneg %p197
      %p204 = scmp.eq.s32.totalorder %s20, 3
      %p205 = por %p203, %p204
      %p206 = scmp.ne.s32.totalorder %s198, %s201
      %p207 = scmp.eq.s32.totalorder %s20, 0
      %p208 = por %p206, %p207
      %p209 = scmp.ne.s32.totalorder %s198, %s201
      %p210 = scmp.eq.s32.totalorder %s25, 3
      %p211 = por %p209, %p210
      %p212 = scmp.ne.s32.totalorder %s201, %s202
      %p213 = scmp.eq.s32.totalorder %s25, 0
      %p214 = por %p212, %p213
      %p215 = scmp.ne.s32.totalorder %s201, %s202
      %p216 = scmp.eq.s32.totalorder %s26, 3
      %p217 = por %p215, %p216
      %p219 = scmp.ne.s32.totalorder %s202, %s218
      %p220 = scmp.eq.s32.totalorder %s26, 0
      %p221 = por %p219, %p220
      %s222 = ssub.s32 %s28, %s35
      %p223 = scmp.eq.s32.totalorder %s222, 0
      %s225 = sadd.s32 %s224, 1
      %s226 = scalar_select %p223, %s224, %s225
      %p229 = pneg %p223
      %p230 = scmp.eq.s32.totalorder %s20, 3
      %p231 = por %p229, %p230
      %p232 = scmp.ne.s32.totalorder %s224, %s227
      %p233 = scmp.eq.s32.totalorder %s20, 0
      %p234 = por %p232, %p233
      %p235 = scmp.ne.s32.totalorder %s224, %s227
      %p236 = scmp.eq.s32.totalorder %s25, 3
      %p237 = por %p235, %p236
      %p238 = scmp.ne.s32.totalorder %s227, %s228
      %p239 = scmp.eq.s32.totalorder %s25, 0
      %p240 = por %p238, %p239
      %p241 = scmp.ne.s32.totalorder %s227, %s228
      %p242 = scmp.eq.s32.totalorder %s26, 3
      %p243 = por %p241, %p242
      %p245 = scmp.ne.s32.totalorder %s228, %s244
      %p246 = scmp.eq.s32.totalorder %s26, 0
      %p247 = por %p245, %p246
      %s248 = ssub.s32 %s27, %s39
      %p249 = scmp.eq.s32.totalorder %s248, 0
      %s251 = sadd.s32 %s250, 1
      %s252 = scalar_select %p249, %s250, %s251
      %p255 = pneg %p249
      %p256 = scmp.eq.s32.totalorder %s20, 3
      %p257 = por %p255, %p256
      %p258 = scmp.ne.s32.totalorder %s250, %s253
      %p259 = scmp.eq.s32.totalorder %s20, 0
      %p260 = por %p258, %p259
      %p261 = scmp.ne.s32.totalorder %s250, %s253
      %p262 = scmp.eq.s32.totalorder %s25, 3
      %p263 = por %p261, %p262
      %p264 = scmp.ne.s32.totalorder %s253, %s254
      %p265 = scmp.eq.s32.totalorder %s25, 0
      %p266 = por %p264, %p265
      %p267 = scmp.ne.s32.totalorder %s253, %s254
      %p268 = scmp.eq.s32.totalorder %s26, 3
      %p269 = por %p267, %p268
      %p271 = scmp.ne.s32.totalorder %s254, %s270
      %p272 = scmp.eq.s32.totalorder %s26, 0
      %p273 = por %p271, %p272
      %p274 = scmp.le.s32.totalorder 1, %s20
      %p275 = scmp.lt.s32.totalorder %s20, 5
      %p276 = pnand %p274, %p275
      %p277 = pneg %p276
      // Predicated region
      $region9: #{tpu_custom_call.1} parent=5 // pred_check
        _
      $region10: #{tpu_custom_call.1} parent=5 // pred_check_branch
        %279 = sbr.rel (%p276) target = $region12
      $region11: #{tpu_custom_call.1} parent=5 // pred_region
        %s280 = ssub.s32 %s20, 1
      $region12: #{tpu_custom_call.1} parent=5 // pred_fallthru
        _
      %p281 = scmp.lt.s32.totalorder %s20, 4
      // Predicated region
      $region13: #{tpu_custom_call.1} parent=5 // pred_check
        %p282 = pneg %p281
      $region14: #{tpu_custom_call.1} parent=5 // pred_check_branch
        %284 = sbr.rel (%p282) target = $region16
      $region15: #{tpu_custom_call.1} parent=5 // pred_region
        // Predicated region
        $region17: #{tpu_custom_call.1} parent=15 // pred_check
          %p285 = pneg %p52
        $region18: #{tpu_custom_call.1} parent=15 // pred_check_branch
          %287 = sbr.rel (%p285) target = $region20
        $region19: #{tpu_custom_call.1} parent=15 // pred_region
          %s288 = sand.u32 %s42, 1
          %s289 = scalar_lea.sflag [#allocation4], %s288
          %s290 = sand.u32 %s42, 1
          %s291 = smul.addr %s290, 8
          %s292 = scalar_lea.vmem [#allocation3], %s291
          %s294 = ssub.s32 128, 128
          %295 = vsyncadd %s289, %s294
          %s296 = smul.addr %s27, 128
          %s297 = scalar_lea.hbm %s0, %s296
          %s299 = sshll.u32 %s292, 4
          %s300 = int_to_ptr.vmem [resolvable:$true] %s299
          %302 = dma.hbm_to_vmem [thread:$0]  %s297, 128, %s300, %s289
        $region20: #{tpu_custom_call.1} parent=15 // pred_fallthru
          _
        // Predicated region
        $region21: #{tpu_custom_call.1} parent=15 // pred_check
          %p303 = pneg %p78
        $region22: #{tpu_custom_call.1} parent=15 // pred_check_branch
          %305 = sbr.rel (%p303) target = $region24
        $region23: #{tpu_custom_call.1} parent=15 // pred_region
          %p306 = scmp.lt.s32.totalorder %s28, 1
          %s307 = scalar_select %p306, %s28, 1
          %s308 = smul.addr %s307, 8
          %s309 = smul.addr %s308, 4
          %s310 = scalar_lea.vmem %s1, %s309
        $region24: #{tpu_custom_call.1} parent=15 // pred_fallthru
          _
        // Predicated region
        $region25: #{tpu_custom_call.1} parent=15 // pred_check
          %p311 = pneg %p104
        $region26: #{tpu_custom_call.1} parent=15 // pred_check_branch
          %313 = sbr.rel (%p311) target = $region28
        $region27: #{tpu_custom_call.1} parent=15 // pred_region
          %p314 = scmp.lt.s32.totalorder %s28, 1
          %s315 = scalar_select %p314, %s28, 1
          %s316 = smul.addr %s315, 4
          %s317 = smul.addr %s316, 4
          %s318 = scalar_lea.vmem %s2, %s317
        $region28: #{tpu_custom_call.1} parent=15 // pred_fallthru
          _
        // Predicated region
        $region29: #{tpu_custom_call.1} parent=15 // pred_check
          %p319 = pneg %p130
        $region30: #{tpu_custom_call.1} parent=15 // pred_check_branch
          %321 = sbr.rel (%p319) target = $region32
        $region31: #{tpu_custom_call.1} parent=15 // pred_region
          %p322 = scmp.lt.s32.totalorder %s28, 1
          %s323 = scalar_select %p322, %s28, 1
          %s324 = smul.addr %s323, 4
          %s325 = smul.addr %s324, 4
          %s326 = scalar_lea.vmem %s3, %s325
        $region32: #{tpu_custom_call.1} parent=15 // pred_fallthru
          _
        // Predicated region
        $region33: #{tpu_custom_call.1} parent=15 // pred_check
          %p327 = pneg %p156
        $region34: #{tpu_custom_call.1} parent=15 // pred_check_branch
          %329 = sbr.rel (%p327) target = $region36
        $region35: #{tpu_custom_call.1} parent=15 // pred_region
          %p330 = scmp.lt.s32.totalorder %s28, 1
          %s331 = scalar_select %p330, %s28, 1
          %s332 = smul.addr %s331, 4
          %s333 = smul.addr %s332, 4
          %s334 = scalar_lea.vmem %s4, %s333
        $region36: #{tpu_custom_call.1} parent=15 // pred_fallthru
          _
        // Predicated region
        $region37: #{tpu_custom_call.1} parent=15 // pred_check
          %p335 = pneg %p182
        $region38: #{tpu_custom_call.1} parent=15 // pred_check_branch
          %337 = sbr.rel (%p335) target = $region40
        $region39: #{tpu_custom_call.1} parent=15 // pred_region
          %p338 = scmp.lt.s32.totalorder %s28, 1
          %s339 = scalar_select %p338, %s28, 1
          %s340 = smul.addr %s339, 16
          %s341 = smul.addr %s340, 4
          %s342 = scalar_lea.vmem %s5, %s341
        $region40: #{tpu_custom_call.1} parent=15 // pred_fallthru
          _
        // Predicated region
        $region41: #{tpu_custom_call.1} parent=15 // pred_check
          %p343 = pneg %p208
        $region42: #{tpu_custom_call.1} parent=15 // pred_check_branch
          %345 = sbr.rel (%p343) target = $region44
        $region43: #{tpu_custom_call.1} parent=15 // pred_region
          %p346 = scmp.lt.s32.totalorder %s28, 1
          %s347 = scalar_select %p346, %s28, 1
          %s348 = smul.addr %s347, 8
          %s349 = scalar_lea.vmem %s6, %s348
        $region44: #{tpu_custom_call.1} parent=15 // pred_fallthru
          _
        // Predicated region
        $region45: #{tpu_custom_call.1} parent=15 // pred_check
          %p350 = pneg %p234
        $region46: #{tpu_custom_call.1} parent=15 // pred_check_branch
          %352 = sbr.rel (%p350) target = $region48
        $region47: #{tpu_custom_call.1} parent=15 // pred_region
          %p353 = scmp.lt.s32.totalorder %s28, 1
          %s354 = scalar_select %p353, %s28, 1
          %s355 = scalar_lea.vmem %s7, %s354
        $region48: #{tpu_custom_call.1} parent=15 // pred_fallthru
          _
      $region16: #{tpu_custom_call.1} parent=5 // pred_fallthru
        _
      %p356 = scmp.le.s32.totalorder 1, %s20
      %p357 = scmp.lt.s32.totalorder %s20, 5
      %p358 = pnand %p356, %p357
      %p359 = pneg %p358
      // Predicated region
      $region49: #{tpu_custom_call.1} parent=5 // pred_check
        _
      $region50: #{tpu_custom_call.1} parent=5 // pred_check_branch
        %361 = sbr.rel (%p358) target = $region52
      $region51: #{tpu_custom_call.1} parent=5 // pred_region
        %s362 = ssub.s32 %s20, 1
        %s363 = sand.u32 %s45, 1
        %s364 = scalar_lea.sflag [#allocation4], %s363
        %s365 = sand.u32 %s45, 1
        %s366 = smul.addr %s365, 8
        %s367 = scalar_lea.vmem [#allocation3], %s366
        // Predicated region
        $region53: #{tpu_custom_call.1} parent=51 // pred_check
          %p368 = pneg %p58
        $region54: #{tpu_custom_call.1} parent=51 // pred_check_branch
          %370 = sbr.rel (%p368) target = $region56
        $region55: #{tpu_custom_call.1} parent=51 // pred_region
          %371 = dma.done %s364, 128
        $region56: #{tpu_custom_call.1} parent=51 // pred_fallthru
          _
        %s372 = sand.u32 %s45, 1
        %s373 = scalar_lea.sflag [#allocation4], %s372
        %s374 = sand.u32 %s45, 1
        %s375 = smul.addr %s374, 8
        %s376 = scalar_lea.vmem [#allocation3], %s375
        %p377 = pneg %p58
        %p378 = pneg %p55
        %p379 = scmp.lt.s32.totalorder %s30, 1
        %s380 = scalar_select %p379, %s30, 1
        %s381 = smul.addr %s380, 8
        %s382 = smul.addr %s381, 4
        %s383 = scalar_lea.vmem %s1, %s382
        %p384 = pneg %p84
        %p385 = pneg %p81
        %p386 = scmp.lt.s32.totalorder %s30, 1
        %s387 = scalar_select %p386, %s30, 1
        %s388 = smul.addr %s387, 4
        %s389 = smul.addr %s388, 4
        %s390 = scalar_lea.vmem %s2, %s389
        %p391 = pneg %p110
        %p392 = pneg %p107
        %p393 = scmp.lt.s32.totalorder %s30, 1
        %s394 = scalar_select %p393, %s30, 1
        %s395 = smul.addr %s394, 4
        %s396 = smul.addr %s395, 4
        %s397 = scalar_lea.vmem %s3, %s396
        %p398 = pneg %p136
        %p399 = pneg %p133
        %p400 = scmp.lt.s32.totalorder %s30, 1
        %s401 = scalar_select %p400, %s30, 1
        %s402 = smul.addr %s401, 4
        %s403 = smul.addr %s402, 4
        %s404 = scalar_lea.vmem %s4, %s403
        %p405 = pneg %p162
        %p406 = pneg %p159
        %p407 = scmp.lt.s32.totalorder %s30, 1
        %s408 = scalar_select %p407, %s30, 1
        %s409 = smul.addr %s408, 16
        %s410 = smul.addr %s409, 4
        %s411 = scalar_lea.vmem %s5, %s410
        %p412 = pneg %p188
        %p413 = pneg %p185
        %p414 = scmp.lt.s32.totalorder %s30, 1
        %s415 = scalar_select %p414, %s30, 1
        %s416 = smul.addr %s415, 8
        %s417 = scalar_lea.vmem %s6, %s416
        %p418 = pneg %p214
        %p419 = pneg %p211
        %p420 = scmp.lt.s32.totalorder %s30, 1
        %s421 = scalar_select %p420, %s30, 1
        %s422 = scalar_lea.vmem %s7, %s421
        %p423 = pneg %p240
        %p424 = pneg %p237
        %p425 = pneg %p266
        %p426 = pneg %p263
        %s427 = sand.u32 %s253, 1
        %s428 = scalar_lea.sflag [#allocation5], %s427
        %s429 = sand.u32 %s253, 1
        %s430 = smul.addr %s429, 8
        %s431 = scalar_lea.vmem [#allocation6], %s430
        %p432 = scmp.lt.s32.totalorder %s30, 1
        %s433 = scalar_select %p432, %s30, 1
        %s434 = smul.addr %s433, 8
        %s435 = smul.addr %s434, 4
        %s436 = scalar_lea.vmem %s1, %s435
        %p437 = scmp.lt.s32.totalorder %s30, 1
        %s438 = scalar_select %p437, %s30, 1
        %s439 = smul.addr %s438, 4
        %s440 = smul.addr %s439, 4
        %s441 = scalar_lea.vmem %s2, %s440
        %p442 = scmp.lt.s32.totalorder %s30, 1
        %s443 = scalar_select %p442, %s30, 1
        %s444 = smul.addr %s443, 4
        %s445 = smul.addr %s444, 4
        %s446 = scalar_lea.vmem %s3, %s445
        %p447 = scmp.lt.s32.totalorder %s30, 1
        %s448 = scalar_select %p447, %s30, 1
        %s449 = smul.addr %s448, 4
        %s450 = smul.addr %s449, 4
        %s451 = scalar_lea.vmem %s4, %s450
        %p452 = scmp.lt.s32.totalorder %s30, 1
        %s453 = scalar_select %p452, %s30, 1
        %s454 = smul.addr %s453, 16
        %s455 = smul.addr %s454, 4
        %s456 = scalar_lea.vmem %s5, %s455
        %p457 = scmp.lt.s32.totalorder %s30, 1
        %s458 = scalar_select %p457, %s30, 1
        %s459 = smul.addr %s458, 8
        %s460 = scalar_lea.vmem %s6, %s459
        %p461 = scmp.lt.s32.totalorder %s30, 1
        %s462 = scalar_select %p461, %s30, 1
        %s463 = scalar_lea.vmem %s7, %s462
        %p465 = scmp.eq.s32.totalorder %s30, 0
        // Predicated region
        $region57: #{tpu_custom_call.1} parent=51 // pred_check
          %p466 = pneg %p465
        $region58: #{tpu_custom_call.1} parent=51 // pred_check_branch
          %468 = sbr.rel (%p466) target = $region60
        $region59: #{tpu_custom_call.1} parent=51 // pred_region
          %v469 = vld [vmem:[%s367] sm:$0xff]
          %vm470 = vcmask 261120
          %471 = vst.msk [vmem:[#allocation2] sm:$0xff] %vm470, %v469
        $region60: #{tpu_custom_call.1} parent=51 // pred_fallthru
          _
        %v472 = vld [vmem:[#allocation2] sm:$0xff]
        %v473 = vld [vmem:[%s460] sm:$0xff]
        %vm474 = vcmask 261120
        %v475 = vsel %vm474, %v472, 0.0
        %476 = vadd.xlane.f32.xlu0 %v475
        %v477 = vpop.xlane.xlu0 %476
        %v478 = vrcp.pop 32.0
        %v479 = vmul.f32 %v477, %v478
        %v480 = vsub.f32 %v472, %v479
        %v481 = vmul.f32 %v480, %v480
        %v482 = vsel %vm474, %v481, 0.0
        %483 = vadd.xlane.f32.xlu0 %v482
        %v484 = vpop.xlane.xlu0 %483
        %v485 = vmul.f32 %v484, %v478
        %v486 = vadd.f32 %v485, 1e-05
        %v487 = vrsqrt.pop %v486
        %v488 = vmul.f32 %v480, %v487
        %v489 = vlaneseq
        %v490 = vshrl.u32 %v489, 7
        %v491 = vsub.s32 0, %v490
        %v492 = vrot.slane %v473, %v491
        %v493 = vmul.f32 %v488, %v492
        %v494 = vlaneseq
        %v495 = vshrl.u32 %v494, 7
        %v496 = vsub.s32 1, %v495
        %v497 = vrot.slane %v473, %v496
        %v498 = vadd.f32 %v493, %v497
        %v499 = vpack.c.bf16 %v498, %v498
        %v500 = vld [vmem:[%s441] sm:$0xf]
        %v501 = vld [vmem:[%s441 + $0x4] sm:$0xf]
        %v502 = vld [vmem:[%s441 + $0x8] sm:$0xf]
        %v503 = vld [vmem:[%s441 + $0xc] sm:$0xf]
        %v508 = vunpack.c.l.b16 %v500
        %v509 = vunpack.c.l.b16 %v501
        %v510 = vunpack.c.l.b16 %v502
        %v511 = vunpack.c.l.b16 %v503
        %v512 = vpack.c.b16 %v509, %v508
        %v513 = vpack.c.b16 %v511, %v510
        %v517 = vsel %vm474, %v499, 0
        %519 = vmatprep.subr.bf16.mxu0 0
        %520 = vmatpush1.bf16.msra.mxu0 %v512
        %521 = vmatprep.subr.bf16.mxu0 0
        %522 = vmatpush1.bf16.msra.mxu0 %v513
        %523 = vmatprep.subr.bf16.mxu0 0
        %524 = vmatpush1.bf16.msra.mxu0 0
        %525 = vmatprep.subr.bf16.mxu0 0
        %526 = vmatpush1.bf16.msra.mxu0 0
        %527 = vmatprep.subr.bf16.mxu0 0
        %528 = vmatpush1.bf16.msra.mxu0 0
        %529 = vmatprep.subr.bf16.mxu0 0
        %530 = vmatpush1.bf16.msra.mxu0 0
        %531 = vmatprep.subr.bf16.mxu0 0
        %532 = vmatpush1.bf16.msra.mxu0 0
        %533 = vmatprep.subr.bf16.mxu0 0
        %534 = vmatpush1.bf16.msra.mxu0 0
        %535 = vmatprep.subr.bf16.mxu0 0
        %536 = vmatpush1.bf16.msra.mxu0 0
        %537 = vmatprep.subr.bf16.mxu0 0
        %538 = vmatpush1.bf16.msra.mxu0 0
        %539 = vmatprep.subr.bf16.mxu0 0
        %540 = vmatpush1.bf16.msra.mxu0 0
        %541 = vmatprep.subr.bf16.mxu0 0
        %542 = vmatpush1.bf16.msra.mxu0 0
        %543 = vmatprep.subr.bf16.mxu0 0
        %544 = vmatpush1.bf16.msra.mxu0 0
        %545 = vmatprep.subr.bf16.mxu0 0
        %546 = vmatpush1.bf16.msra.mxu0 0
        %547 = vmatprep.subr.bf16.mxu0 0
        %548 = vmatpush1.bf16.msra.mxu0 0
        %549 = vmatprep.subr.bf16.mxu0 0
        %550 = vmatpush1.bf16.msra.mxu0 0
        %551 = vmatprep.mubr.bf16.mxu0 0
        %552 = vmatmul.mubr.bf16.gmra.mrb[0].mxu0 %v517
        %v553 = vpop.f32.mrb[0].mxu0
        %v554 = vadd.f32 0.0, %v553
        %v555 = vpop.f32.mrb[0].mxu0
        %v556 = vpop.f32.mrb[0].mxu0
        %v557 = vpop.f32.mrb[0].mxu0
        %558 = vdwg.mxu0
        %v559 = vpack.c.bf16 %v554, %v554
        %561 = vrot.lane.b32.xlu0 %v559, 120
        %v562 = vpop.permute.xlu0 %561
        %564 = vrot.lane.b32.xlu0 %v559, 112
        %v565 = vpop.permute.xlu0 %564
        %567 = vrot.lane.b32.xlu0 %v559, 104
        %v568 = vpop.permute.xlu0 %567
        %570 = vrot.lane.b32.xlu0 %v559, 96
        %v571 = vpop.permute.xlu0 %570
        %573 = vrot.lane.b32.xlu0 %v559, 88
        %v574 = vpop.permute.xlu0 %573
        %576 = vrot.lane.b32.xlu0 %v559, 80
        %v577 = vpop.permute.xlu0 %576
        %579 = vrot.lane.b32.xlu0 %v559, 72
        %v580 = vpop.permute.xlu0 %579
        %582 = vrot.lane.b32.xlu0 %v559, 64
        %v583 = vpop.permute.xlu0 %582
        %584 = vrot.lane.b32.xlu0 %v559, 56
        %v585 = vpop.permute.xlu0 %584
        %586 = vrot.lane.b32.xlu0 %v559, 48
        %v587 = vpop.permute.xlu0 %586
        %588 = vrot.lane.b32.xlu0 %v559, 40
        %v589 = vpop.permute.xlu0 %588
        %v590 = vcombine.low %v559, %v571
        %v592 = vunpack.c.l.s4 1983009808
        %v593 = vunpack.c.0.s8 %v592
        %v594 = vlaneseq
        %v595 = vshrl.u32 %v594, 7
        %v596 = vsub.s32 %v593, %v595
        %v597 = vrot.slane %v590, %v596
        %v598 = vcombine.low %v565, %v577
        %v600 = vunpack.c.l.s4 1983009808
        %v601 = vunpack.c.0.s8 %v600
        %v602 = vlaneseq
        %v603 = vshrl.u32 %v602, 7
        %v604 = vsub.s32 %v601, %v603
        %v605 = vrot.slane %v598, %v604
        %v608 = vunpack.c.l.s4 1983009808
        %v609 = vunpack.c.0.s8 %v608
        %v610 = vlaneseq
        %v611 = vshrl.u32 %v610, 7
        %v612 = vsub.s32 %v609, %v611
        %v613 = vrot.slane %v583, %v612
        %v616 = vunpack.c.l.s4 1983009808
        %v617 = vunpack.c.0.s8 %v616
        %v618 = vlaneseq
        %v619 = vshrl.u32 %v618, 7
        %v620 = vsub.s32 %v617, %v619
        %v621 = vrot.slane %v587, %v620
        %v622 = vcombine.low %v597, %v605
        %v623 = vcombine.high %v597, %v605
        %v625 = vunpack.c.l.s4 1934713408
        %v626 = vunpack.c.0.s8 %v625
        %v627 = vlaneseq
        %v628 = vshrl.u32 %v627, 7
        %v629 = vsub.s32 %v626, %v628
        %v630 = vrot.slane %v622, %v629
        %v632 = vunpack.c.l.s4 1934713408
        %v633 = vunpack.c.0.s8 %v632
        %v634 = vlaneseq
        %v635 = vshrl.u32 %v634, 7
        %v636 = vsub.s32 %v633, %v635
        %v637 = vrot.slane %v623, %v636
        %v638 = vcombine.low %v613, %v621
        %v639 = vcombine.high %v613, %v621
        %v641 = vunpack.c.l.s4 1934713408
        %v642 = vunpack.c.0.s8 %v641
        %v643 = vlaneseq
        %v644 = vshrl.u32 %v643, 7
        %v645 = vsub.s32 %v642, %v644
        %v646 = vrot.slane %v638, %v645
        %v648 = vunpack.c.l.s4 1934713408
        %v649 = vunpack.c.0.s8 %v648
        %v650 = vlaneseq
        %v651 = vshrl.u32 %v650, 7
        %v652 = vsub.s32 %v649, %v651
        %v653 = vrot.slane %v639, %v652
        %v654 = vcombine.low %v630, %v646
        %v655 = vcombine.high %v630, %v646
        %v656 = vcombine.low %v637, %v653
        %v657 = vcombine.high %v637, %v653
        %v658 = vcombine.low %v562, %v574
        %v660 = vunpack.c.l.s4 1983009808
        %v661 = vunpack.c.0.s8 %v660
        %v662 = vlaneseq
        %v663 = vshrl.u32 %v662, 7
        %v664 = vsub.s32 %v661, %v663
        %v665 = vrot.slane %v658, %v664
        %v666 = vcombine.low %v568, %v580
        %v668 = vunpack.c.l.s4 1983009808
        %v669 = vunpack.c.0.s8 %v668
        %v670 = vlaneseq
        %v671 = vshrl.u32 %v670, 7
        %v672 = vsub.s32 %v669, %v671
        %v673 = vrot.slane %v666, %v672
        %v676 = vunpack.c.l.s4 1983009808
        %v677 = vunpack.c.0.s8 %v676
        %v678 = vlaneseq
        %v679 = vshrl.u32 %v678, 7
        %v680 = vsub.s32 %v677, %v679
        %v681 = vrot.slane %v585, %v680
        %v684 = vunpack.c.l.s4 1983009808
        %v685 = vunpack.c.0.s8 %v684
        %v686 = vlaneseq
        %v687 = vshrl.u32 %v686, 7
        %v688 = vsub.s32 %v685, %v687
        %v689 = vrot.slane %v589, %v688
        %v690 = vcombine.low %v665, %v673
        %v691 = vcombine.high %v665, %v673
        %v693 = vunpack.c.l.s4 1934713408
        %v694 = vunpack.c.0.s8 %v693
        %v695 = vlaneseq
        %v696 = vshrl.u32 %v695, 7
        %v697 = vsub.s32 %v694, %v696
        %v698 = vrot.slane %v690, %v697
        %v700 = vunpack.c.l.s4 1934713408
        %v701 = vunpack.c.0.s8 %v700
        %v702 = vlaneseq
        %v703 = vshrl.u32 %v702, 7
        %v704 = vsub.s32 %v701, %v703
        %v705 = vrot.slane %v691, %v704
        %v706 = vcombine.low %v681, %v689
        %v707 = vcombine.high %v681, %v689
        %v709 = vunpack.c.l.s4 1934713408
        %v710 = vunpack.c.0.s8 %v709
        %v711 = vlaneseq
        %v712 = vshrl.u32 %v711, 7
        %v713 = vsub.s32 %v710, %v712
        %v714 = vrot.slane %v706, %v713
        %v716 = vunpack.c.l.s4 1934713408
        %v717 = vunpack.c.0.s8 %v716
        %v718 = vlaneseq
        %v719 = vshrl.u32 %v718, 7
        %v720 = vsub.s32 %v717, %v719
        %v721 = vrot.slane %v707, %v720
        %v722 = vcombine.low %v698, %v714
        %v723 = vcombine.high %v698, %v714
        %v724 = vcombine.low %v705, %v721
        %v725 = vcombine.high %v705, %v721
        %v728 = vpack.i.b16 %v722, %v654
        %v730 = vshrl.u32 %v654, 16
        %v731 = vshrl.u32 %v722, 16
        %v732 = vpack.i.b16 %v731, %v730
        %v736 = vpack.i.b16 %v723, %v655
        %v738 = vshrl.u32 %v655, 16
        %v739 = vshrl.u32 %v723, 16
        %v740 = vpack.i.b16 %v739, %v738
        %v744 = vpack.i.b16 %v724, %v656
        %v746 = vshrl.u32 %v656, 16
        %v747 = vshrl.u32 %v724, 16
        %v748 = vpack.i.b16 %v747, %v746
        %v752 = vpack.i.b16 %v725, %v657
        %v754 = vshrl.u32 %v657, 16
        %v755 = vshrl.u32 %v725, 16
        %v756 = vpack.i.b16 %v755, %v754
        %v758 = vcombine.low %v728, %v744
        %v759 = vcombine.high %v728, %v744
        %v761 = vunpack.c.l.s4 1983009808
        %v762 = vunpack.c.0.s8 %v761
        %v763 = vlaneseq
        %v764 = vshrl.u32 %v763, 7
        %v765 = vsub.s32 %v762, %v764
        %v766 = vrot.slane %v758, %v765
        %v768 = vunpack.c.l.s4 1983009808
        %v769 = vunpack.c.0.s8 %v768
        %v770 = vlaneseq
        %v771 = vshrl.u32 %v770, 7
        %v772 = vsub.s32 %v769, %v771
        %v773 = vrot.slane %v759, %v772
        %v774 = vcombine.low %v736, %v752
        %v775 = vcombine.high %v736, %v752
        %v777 = vunpack.c.l.s4 1983009808
        %v778 = vunpack.c.0.s8 %v777
        %v779 = vlaneseq
        %v780 = vshrl.u32 %v779, 7
        %v781 = vsub.s32 %v778, %v780
        %v782 = vrot.slane %v774, %v781
        %v784 = vunpack.c.l.s4 1983009808
        %v785 = vunpack.c.0.s8 %v784
        %v786 = vlaneseq
        %v787 = vshrl.u32 %v786, 7
        %v788 = vsub.s32 %v785, %v787
        %v789 = vrot.slane %v775, %v788
        %v790 = vcombine.low %v766, %v782
        %v791 = vcombine.high %v766, %v782
        %v793 = vunpack.c.l.s4 1934713408
        %v794 = vunpack.c.0.s8 %v793
        %v795 = vlaneseq
        %v796 = vshrl.u32 %v795, 7
        %v797 = vsub.s32 %v794, %v796
        %v798 = vrot.slane %v790, %v797
        %v800 = vunpack.c.l.s4 1934713408
        %v801 = vunpack.c.0.s8 %v800
        %v802 = vlaneseq
        %v803 = vshrl.u32 %v802, 7
        %v804 = vsub.s32 %v801, %v803
        %v805 = vrot.slane %v791, %v804
        %v806 = vcombine.low %v773, %v789
        %v808 = vunpack.c.l.s4 1934713408
        %v809 = vunpack.c.0.s8 %v808
        %v810 = vlaneseq
        %v811 = vshrl.u32 %v810, 7
        %v812 = vsub.s32 %v809, %v811
        %v813 = vrot.slane %v806, %v812
        %v814 = vcombine.high %v798, 0
        %v815 = vcombine.high %v805, 0
        %v816 = vcombine.high %v813, 0
        %v817 = vcombine.low %v732, %v748
        %v818 = vcombine.high %v732, %v748
        %v820 = vunpack.c.l.s4 1983009808
        %v821 = vunpack.c.0.s8 %v820
        %v822 = vlaneseq
        %v823 = vshrl.u32 %v822, 7
        %v824 = vsub.s32 %v821, %v823
        %v825 = vrot.slane %v817, %v824
        %v827 = vunpack.c.l.s4 1983009808
        %v828 = vunpack.c.0.s8 %v827
        %v829 = vlaneseq
        %v830 = vshrl.u32 %v829, 7
        %v831 = vsub.s32 %v828, %v830
        %v832 = vrot.slane %v818, %v831
        %v833 = vcombine.low %v740, %v756
        %v834 = vcombine.high %v740, %v756
        %v836 = vunpack.c.l.s4 1983009808
        %v837 = vunpack.c.0.s8 %v836
        %v838 = vlaneseq
        %v839 = vshrl.u32 %v838, 7
        %v840 = vsub.s32 %v837, %v839
        %v841 = vrot.slane %v833, %v840
        %v843 = vunpack.c.l.s4 1983009808
        %v844 = vunpack.c.0.s8 %v843
        %v845 = vlaneseq
        %v846 = vshrl.u32 %v845, 7
        %v847 = vsub.s32 %v844, %v846
        %v848 = vrot.slane %v834, %v847
        %v849 = vcombine.low %v825, %v841
        %v850 = vcombine.high %v825, %v841
        %v852 = vunpack.c.l.s4 1934713408
        %v853 = vunpack.c.0.s8 %v852
        %v854 = vlaneseq
        %v855 = vshrl.u32 %v854, 7
        %v856 = vsub.s32 %v853, %v855
        %v857 = vrot.slane %v849, %v856
        %v859 = vunpack.c.l.s4 1934713408
        %v860 = vunpack.c.0.s8 %v859
        %v861 = vlaneseq
        %v862 = vshrl.u32 %v861, 7
        %v863 = vsub.s32 %v860, %v862
        %v864 = vrot.slane %v850, %v863
        %v865 = vcombine.low %v832, %v848
        %v867 = vunpack.c.l.s4 1934713408
        %v868 = vunpack.c.0.s8 %v867
        %v869 = vlaneseq
        %v870 = vshrl.u32 %v869, 7
        %v871 = vsub.s32 %v868, %v870
        %v872 = vrot.slane %v865, %v871
        %v873 = vcombine.high %v857, 0
        %v874 = vcombine.high %v864, 0
        %v875 = vcombine.high %v872, 0
        %v878 = vpack.i.b16 %v857, %v798
        %v879 = vshrl.u32 %v798, 16
        %v880 = vshrl.u32 %v857, 16
        %v881 = vpack.i.b16 %v880, %v879
        %v884 = vpack.i.b16 %v873, %v814
        %v885 = vshrl.u32 %v814, 16
        %v886 = vshrl.u32 %v873, 16
        %v887 = vpack.i.b16 %v886, %v885
        %v890 = vpack.i.b16 %v864, %v805
        %v891 = vshrl.u32 %v805, 16
        %v892 = vshrl.u32 %v864, 16
        %v893 = vpack.i.b16 %v892, %v891
        %v896 = vpack.i.b16 %v874, %v815
        %v897 = vshrl.u32 %v815, 16
        %v898 = vshrl.u32 %v874, 16
        %v899 = vpack.i.b16 %v898, %v897
        %v902 = vpack.i.b16 %v872, %v813
        %v903 = vshrl.u32 %v813, 16
        %v904 = vshrl.u32 %v872, 16
        %v905 = vpack.i.b16 %v904, %v903
        %v908 = vpack.i.b16 %v875, %v816
        %v909 = vshrl.u32 %v816, 16
        %v910 = vshrl.u32 %v875, 16
        %v911 = vpack.i.b16 %v910, %v909
        %v912 = vld [vmem:[%s436] sm:$0xf]
        %v913 = vld [vmem:[%s436 + $0x4] sm:$0xf]
        %v914 = vld [vmem:[%s436 + $0x8] sm:$0xf]
        %v915 = vld [vmem:[%s436 + $0xc] sm:$0xf]
        %v916 = vld [vmem:[%s436 + $0x10] sm:$0xf]
        %v917 = vld [vmem:[%s436 + $0x14] sm:$0xf]
        %v918 = vld [vmem:[%s436 + $0x18] sm:$0xf]
        %v919 = vld [vmem:[%s436 + $0x1c] sm:$0xf]
        %vm920 = vcmask 64512
        %v922 = vsel %vm920, %v728, 0
        %v925 = vsel %vm920, %v912, 0
        %927 = vmatprep.subr.bf16.mxu0 0
        %928 = vmatpush1.bf16.xpose.msra.mxu0 %v925
        %929 = vmatprep.subr.bf16.mxu0 0
        %930 = vmatpush1.bf16.xpose.msra.mxu0 0
        %931 = vmatprep.subr.bf16.mxu0 0
        %932 = vmatpush1.bf16.xpose.msra.mxu0 0
        %933 = vmatprep.subr.bf16.mxu0 0
        %934 = vmatpush1.bf16.xpose.msra.mxu0 0
        %935 = vmatprep.subr.bf16.mxu0 0
        %936 = vmatpush1.bf16.xpose.msra.mxu0 0
        %937 = vmatprep.subr.bf16.mxu0 0
        %938 = vmatpush1.bf16.xpose.msra.mxu0 0
        %939 = vmatprep.subr.bf16.mxu0 0
        %940 = vmatpush1.bf16.xpose.msra.mxu0 0
        %941 = vmatprep.subr.bf16.mxu0 0
        %942 = vmatpush1.bf16.xpose.msra.mxu0 0
        %943 = vmatprep.subr.bf16.mxu0 0
        %944 = vmatpush1.bf16.xpose.msra.mxu0 0
        %945 = vmatprep.subr.bf16.mxu0 0
        %946 = vmatpush1.bf16.xpose.msra.mxu0 0
        %947 = vmatprep.subr.bf16.mxu0 0
        %948 = vmatpush1.bf16.xpose.msra.mxu0 0
        %949 = vmatprep.subr.bf16.mxu0 0
        %950 = vmatpush1.bf16.xpose.msra.mxu0 0
        %951 = vmatprep.subr.bf16.mxu0 0
        %952 = vmatpush1.bf16.xpose.msra.mxu0 0
        %953 = vmatprep.subr.bf16.mxu0 0
        %954 = vmatpush1.bf16.xpose.msra.mxu0 0
        %955 = vmatprep.subr.bf16.mxu0 0
        %956 = vmatpush1.bf16.xpose.msra.mxu0 0
        %957 = vmatprep.subr.bf16.mxu0 0
        %958 = vmatpush1.bf16.xpose.msra.mxu0 0
        %959 = vmatprep.mubr.bf16.mxu0 0
        %960 = vmatmul.mubr.bf16.gmra.mrb[0].mxu0 %v922
        %v961 = vpop.f32.mrb[0].mxu0
        %v962 = vadd.f32 0.0, %v961
        %v963 = vpop.f32.mrb[0].mxu0
        %v964 = vpop.f32.mrb[0].mxu0
        %v965 = vpop.f32.mrb[0].mxu0
        %966 = vdwg.mxu0
        %v968 = vsel %vm920, %v732, 0
        %v971 = vsel %vm920, %v913, 0
        %973 = vmatprep.subr.bf16.mxu0 0
        %974 = vmatpush1.bf16.xpose.msra.mxu0 %v971
        %975 = vmatprep.subr.bf16.mxu0 0
        %976 = vmatpush1.bf16.xpose.msra.mxu0 0
        %977 = vmatprep.subr.bf16.mxu0 0
        %978 = vmatpush1.bf16.xpose.msra.mxu0 0
        %979 = vmatprep.subr.bf16.mxu0 0
        %980 = vmatpush1.bf16.xpose.msra.mxu0 0
        %981 = vmatprep.subr.bf16.mxu0 0
        %982 = vmatpush1.bf16.xpose.msra.mxu0 0
        %983 = vmatprep.subr.bf16.mxu0 0
        %984 = vmatpush1.bf16.xpose.msra.mxu0 0
        %985 = vmatprep.subr.bf16.mxu0 0
        %986 = vmatpush1.bf16.xpose.msra.mxu0 0
        %987 = vmatprep.subr.bf16.mxu0 0
        %988 = vmatpush1.bf16.xpose.msra.mxu0 0
        %989 = vmatprep.subr.bf16.mxu0 0
        %990 = vmatpush1.bf16.xpose.msra.mxu0 0
        %991 = vmatprep.subr.bf16.mxu0 0
        %992 = vmatpush1.bf16.xpose.msra.mxu0 0
        %993 = vmatprep.subr.bf16.mxu0 0
        %994 = vmatpush1.bf16.xpose.msra.mxu0 0
        %995 = vmatprep.subr.bf16.mxu0 0
        %996 = vmatpush1.bf16.xpose.msra.mxu0 0
        %997 = vmatprep.subr.bf16.mxu0 0
        %998 = vmatpush1.bf16.xpose.msra.mxu0 0
        %999 = vmatprep.subr.bf16.mxu0 0
        %1000 = vmatpush1.bf16.xpose.msra.mxu0 0
        %1001 = vmatprep.subr.bf16.mxu0 0
        %1002 = vmatpush1.bf16.xpose.msra.mxu0 0
        %1003 = vmatprep.subr.bf16.mxu0 0
        %1004 = vmatpush1.bf16.xpose.msra.mxu0 0
        %1005 = vmatprep.mubr.bf16.mxu0 0
        %1006 = vmatmul.mubr.bf16.gmra.mrb[0].mxu0 %v968
        %v1007 = vpop.f32.mrb[0].mxu0
        %v1008 = vadd.f32 0.0, %v1007
        %v1009 = vpop.f32.mrb[0].mxu0
        %v1010 = vpop.f32.mrb[0].mxu0
        %v1011 = vpop.f32.mrb[0].mxu0
        %1012 = vdwg.mxu0
        %v1014 = vsel %vm920, %v736, 0
        %v1017 = vsel %vm920, %v914, 0
        %1019 = vmatprep.subr.bf16.mxu0 0
        %1020 = vmatpush1.bf16.xpose.msra.mxu0 %v1017
        %1021 = vmatprep.subr.bf16.mxu0 0
        %1022 = vmatpush1.bf16.xpose.msra.mxu0 0
        %1023 = vmatprep.subr.bf16.mxu0 0
        %1024 = vmatpush1.bf16.xpose.msra.mxu0 0
        %1025 = vmatprep.subr.bf16.mxu0 0
        %1026 = vmatpush1.bf16.xpose.msra.mxu0 0
        %1027 = vmatprep.subr.bf16.mxu0 0
        %1028 = vmatpush1.bf16.xpose.msra.mxu0 0
        %1029 = vmatprep.subr.bf16.mxu0 0
        %1030 = vmatpush1.bf16.xpose.msra.mxu0 0
        %1031 = vmatprep.subr.bf16.mxu0 0
        %1032 = vmatpush1.bf16.xpose.msra.mxu0 0
        %1033 = vmatprep.subr.bf16.mxu0 0
        %1034 = vmatpush1.bf16.xpose.msra.mxu0 0
        %1035 = vmatprep.subr.bf16.mxu0 0
        %1036 = vmatpush1.bf16.xpose.msra.mxu0 0
        %1037 = vmatprep.subr.bf16.mxu0 0
        %1038 = vmatpush1.bf16.xpose.msra.mxu0 0
        %1039 = vmatprep.subr.bf16.mxu0 0
        %1040 = vmatpush1.bf16.xpose.msra.mxu0 0
        %1041 = vmatprep.subr.bf16.mxu0 0
        %1042 = vmatpush1.bf16.xpose.msra.mxu0 0
        %1043 = vmatprep.subr.bf16.mxu0 0
        %1044 = vmatpush1.bf16.xpose.msra.mxu0 0
        %1045 = vmatprep.subr.bf16.mxu0 0
        %1046 = vmatpush1.bf16.xpose.msra.mxu0 0
        %1047 = vmatprep.subr.bf16.mxu0 0
        %1048 = vmatpush1.bf16.xpose.msra.mxu0 0
        %1049 = vmatprep.subr.bf16.mxu0 0
        %1050 = vmatpush1.bf16.xpose.msra.mxu0 0
        %1051 = vmatprep.mubr.bf16.mxu0 0
        %1052 = vmatmul.mubr.bf16.gmra.mrb[0].mxu0 %v1014
        %v1053 = vpop.f32.mrb[0].mxu0
        %v1054 = vadd.f32 0.0, %v1053
        %v1055 = vpop.f32.mrb[0].mxu0
        %v1056 = vpop.f32.mrb[0].mxu0
        %v1057 = vpop.f32.mrb[0].mxu0
        %1058 = vdwg.mxu0
        %v1060 = vsel %vm920, %v740, 0
        %v1063 = vsel %vm920, %v915, 0
        %1065 = vmatprep.subr.bf16.mxu0 0
        %1066 = vmatpush1.bf16.xpose.msra.mxu0 %v1063
        %1067 = vmatprep.subr.bf16.mxu0 0
        %1068 = vmatpush1.bf16.xpose.msra.mxu0 0
        %1069 = vmatprep.subr.bf16.mxu0 0
        %1070 = vmatpush1.bf16.xpose.msra.mxu0 0
        %1071 = vmatprep.subr.bf16.mxu0 0
        %1072 = vmatpush1.bf16.xpose.msra.mxu0 0
        %1073 = vmatprep.subr.bf16.mxu0 0
        %1074 = vmatpush1.bf16.xpose.msra.mxu0 0
        %1075 = vmatprep.subr.bf16.mxu0 0
        %1076 = vmatpush1.bf16.xpose.msra.mxu0 0
        %1077 = vmatprep.subr.bf16.mxu0 0
        %1078 = vmatpush1.bf16.xpose.msra.mxu0 0
        %1079 = vmatprep.subr.bf16.mxu0 0
        %1080 = vmatpush1.bf16.xpose.msra.mxu0 0
        %1081 = vmatprep.subr.bf16.mxu0 0
        %1082 = vmatpush1.bf16.xpose.msra.mxu0 0
        %1083 = vmatprep.subr.bf16.mxu0 0
        %1084 = vmatpush1.bf16.xpose.msra.mxu0 0
        %1085 = vmatprep.subr.bf16.mxu0 0
        %1086 = vmatpush1.bf16.xpose.msra.mxu0 0
        %1087 = vmatprep.subr.bf16.mxu0 0
        %1088 = vmatpush1.bf16.xpose.msra.mxu0 0
        %1089 = vmatprep.subr.bf16.mxu0 0
        %1090 = vmatpush1.bf16.xpose.msra.mxu0 0
        %1091 = vmatprep.subr.bf16.mxu0 0
        %1092 = vmatpush1.bf16.xpose.msra.mxu0 0
        %1093 = vmatprep.subr.bf16.mxu0 0
        %1094 = vmatpush1.bf16.xpose.msra.mxu0 0
        %1095 = vmatprep.subr.bf16.mxu0 0
        %1096 = vmatpush1.bf16.xpose.msra.mxu0 0
        %1097 = vmatprep.mubr.bf16.mxu0 0
        %1098 = vmatmul.mubr.bf16.gmra.mrb[0].mxu0 %v1060
        %v1099 = vpop.f32.mrb[0].mxu0
        %v1100 = vadd.f32 0.0, %v1099
        %v1101 = vpop.f32.mrb[0].mxu0
        %v1102 = vpop.f32.mrb[0].mxu0
        %v1103 = vpop.f32.mrb[0].mxu0
        %1104 = vdwg.mxu0
        %v1106 = vsel %vm920, %v744, 0
        %v1109 = vsel %vm920, %v916, 0
        %1111 = vmatprep.subr.bf16.mxu0 0
        %1112 = vmatpush1.bf16.xpose.msra.mxu0 %v1109
        %1113 = vmatprep.subr.bf16.mxu0 0
        %1114 = vmatpush1.bf16.xpose.msra.mxu0 0
        %1115 = vmatprep.subr.bf16.mxu0 0
        %1116 = vmatpush1.bf16.xpose.msra.mxu0 0
        %1117 = vmatprep.subr.bf16.mxu0 0
        %1118 = vmatpush1.bf16.xpose.msra.mxu0 0
        %1119 = vmatprep.subr.bf16.mxu0 0
        %1120 = vmatpush1.bf16.xpose.msra.mxu0 0
        %1121 = vmatprep.subr.bf16.mxu0 0
        %1122 = vmatpush1.bf16.xpose.msra.mxu0 0
        %1123 = vmatprep.subr.bf16.mxu0 0
        %1124 = vmatpush1.bf16.xpose.msra.mxu0 0
        %1125 = vmatprep.subr.bf16.mxu0 0
        %1126 = vmatpush1.bf16.xpose.msra.mxu0 0
        %1127 = vmatprep.subr.bf16.mxu0 0
        %1128 = vmatpush1.bf16.xpose.msra.mxu0 0
        %1129 = vmatprep.subr.bf16.mxu0 0
        %1130 = vmatpush1.bf16.xpose.msra.mxu0 0
        %1131 = vmatprep.subr.bf16.mxu0 0
        %1132 = vmatpush1.bf16.xpose.msra.mxu0 0
        %1133 = vmatprep.subr.bf16.mxu0 0
        %1134 = vmatpush1.bf16.xpose.msra.mxu0 0
        %1135 = vmatprep.subr.bf16.mxu0 0
        %1136 = vmatpush1.bf16.xpose.msra.mxu0 0
        %1137 = vmatprep.subr.bf16.mxu0 0
        %1138 = vmatpush1.bf16.xpose.msra.mxu0 0
        %1139 = vmatprep.subr.bf16.mxu0 0
        %1140 = vmatpush1.bf16.xpose.msra.mxu0 0
        %1141 = vmatprep.subr.bf16.mxu0 0
        %1142 = vmatpush1.bf16.xpose.msra.mxu0 0
        %1143 = vmatprep.mubr.bf16.mxu0 0
        %1144 = vmatmul.mubr.bf16.gmra.mrb[0].mxu0 %v1106
        %v1145 = vpop.f32.mrb[0].mxu0
        %v1146 = vadd.f32 0.0, %v1145
        %v1147 = vpop.f32.mrb[0].mxu0
        %v1148 = vpop.f32.mrb[0].mxu0
        %v1149 = vpop.f32.mrb[0].mxu0
        %1150 = vdwg.mxu0
        %v1152 = vsel %vm920, %v748, 0
        %v1155 = vsel %vm920, %v917, 0
        %1157 = vmatprep.subr.bf16.mxu0 0
        %1158 = vmatpush1.bf16.xpose.msra.mxu0 %v1155
        %1159 = vmatprep.subr.bf16.mxu0 0
        %1160 = vmatpush1.bf16.xpose.msra.mxu0 0
        %1161 = vmatprep.subr.bf16.mxu0 0
        %1162 = vmatpush1.bf16.xpose.msra.mxu0 0
        %1163 = vmatprep.subr.bf16.mxu0 0
        %1164 = vmatpush1.bf16.xpose.msra.mxu0 0
        %1165 = vmatprep.subr.bf16.mxu0 0
        %1166 = vmatpush1.bf16.xpose.msra.mxu0 0
        %1167 = vmatprep.subr.bf16.mxu0 0
        %1168 = vmatpush1.bf16.xpose.msra.mxu0 0
        %1169 = vmatprep.subr.bf16.mxu0 0
        %1170 = vmatpush1.bf16.xpose.msra.mxu0 0
        %1171 = vmatprep.subr.bf16.mxu0 0
        %1172 = vmatpush1.bf16.xpose.msra.mxu0 0
        %1173 = vmatprep.subr.bf16.mxu0 0
        %1174 = vmatpush1.bf16.xpose.msra.mxu0 0
        %1175 = vmatprep.subr.bf16.mxu0 0
        %1176 = vmatpush1.bf16.xpose.msra.mxu0 0
        %1177 = vmatprep.subr.bf16.mxu0 0
        %1178 = vmatpush1.bf16.xpose.msra.mxu0 0
        %1179 = vmatprep.subr.bf16.mxu0 0
        %1180 = vmatpush1.bf16.xpose.msra.mxu0 0
        %1181 = vmatprep.subr.bf16.mxu0 0
        %1182 = vmatpush1.bf16.xpose.msra.mxu0 0
        %1183 = vmatprep.subr.bf16.mxu0 0
        %1184 = vmatpush1.bf16.xpose.msra.mxu0 0
        %1185 = vmatprep.subr.bf16.mxu0 0
        %1186 = vmatpush1.bf16.xpose.msra.mxu0 0
        %1187 = vmatprep.subr.bf16.mxu0 0
        %1188 = vmatpush1.bf16.xpose.msra.mxu0 0
        %1189 = vmatprep.mubr.bf16.mxu0 0
        %1190 = vmatmul.mubr.bf16.gmra.mrb[0].mxu0 %v1152
        %v1191 = vpop.f32.mrb[0].mxu0
        %v1192 = vadd.f32 0.0, %v1191
        %v1193 = vpop.f32.mrb[0].mxu0
        %v1194 = vpop.f32.mrb[0].mxu0
        %v1195 = vpop.f32.mrb[0].mxu0
        %1196 = vdwg.mxu0
        %v1198 = vsel %vm920, %v752, 0
        %v1201 = vsel %vm920, %v918, 0
        %1203 = vmatprep.subr.bf16.mxu0 0
        %1204 = vmatpush1.bf16.xpose.msra.mxu0 %v1201
        %1205 = vmatprep.subr.bf16.mxu0 0
        %1206 = vmatpush1.bf16.xpose.msra.mxu0 0
        %1207 = vmatprep.subr.bf16.mxu0 0
        %1208 = vmatpush1.bf16.xpose.msra.mxu0 0
        %1209 = vmatprep.subr.bf16.mxu0 0
        %1210 = vmatpush1.bf16.xpose.msra.mxu0 0
        %1211 = vmatprep.subr.bf16.mxu0 0
        %1212 = vmatpush1.bf16.xpose.msra.mxu0 0
        %1213 = vmatprep.subr.bf16.mxu0 0
        %1214 = vmatpush1.bf16.xpose.msra.mxu0 0
        %1215 = vmatprep.subr.bf16.mxu0 0
        %1216 = vmatpush1.bf16.xpose.msra.mxu0 0
        %1217 = vmatprep.subr.bf16.mxu0 0
        %1218 = vmatpush1.bf16.xpose.msra.mxu0 0
        %1219 = vmatprep.subr.bf16.mxu0 0
        %1220 = vmatpush1.bf16.xpose.msra.mxu0 0
        %1221 = vmatprep.subr.bf16.mxu0 0
        %1222 = vmatpush1.bf16.xpose.msra.mxu0 0
        %1223 = vmatprep.subr.bf16.mxu0 0
        %1224 = vmatpush1.bf16.xpose.msra.mxu0 0
        %1225 = vmatprep.subr.bf16.mxu0 0
        %1226 = vmatpush1.bf16.xpose.msra.mxu0 0
        %1227 = vmatprep.subr.bf16.mxu0 0
        %1228 = vmatpush1.bf16.xpose.msra.mxu0 0
        %1229 = vmatprep.subr.bf16.mxu0 0
        %1230 = vmatpush1.bf16.xpose.msra.mxu0 0
        %1231 = vmatprep.subr.bf16.mxu0 0
        %1232 = vmatpush1.bf16.xpose.msra.mxu0 0
        %1233 = vmatprep.subr.bf16.mxu0 0
        %1234 = vmatpush1.bf16.xpose.msra.mxu0 0
        %1235 = vmatprep.mubr.bf16.mxu0 0
        %1236 = vmatmul.mubr.bf16.gmra.mrb[0].mxu0 %v1198
        %v1237 = vpop.f32.mrb[0].mxu0
        %v1238 = vadd.f32 0.0, %v1237
        %v1239 = vpop.f32.mrb[0].mxu0
        %v1240 = vpop.f32.mrb[0].mxu0
        %v1241 = vpop.f32.mrb[0].mxu0
        %1242 = vdwg.mxu0
        %v1244 = vsel %vm920, %v756, 0
        %v1247 = vsel %vm920, %v919, 0
        %1249 = vmatprep.subr.bf16.mxu0 0
        %1250 = vmatpush1.bf16.xpose.msra.mxu0 %v1247
        %1251 = vmatprep.subr.bf16.mxu0 0
        %1252 = vmatpush1.bf16.xpose.msra.mxu0 0
        %1253 = vmatprep.subr.bf16.mxu0 0
        %1254 = vmatpush1.bf16.xpose.msra.mxu0 0
        %1255 = vmatprep.subr.bf16.mxu0 0
        %1256 = vmatpush1.bf16.xpose.msra.mxu0 0
        %1257 = vmatprep.subr.bf16.mxu0 0
        %1258 = vmatpush1.bf16.xpose.msra.mxu0 0
        %1259 = vmatprep.subr.bf16.mxu0 0
        %1260 = vmatpush1.bf16.xpose.msra.mxu0 0
        %1261 = vmatprep.subr.bf16.mxu0 0
        %1262 = vmatpush1.bf16.xpose.msra.mxu0 0
        %1263 = vmatprep.subr.bf16.mxu0 0
        %1264 = vmatpush1.bf16.xpose.msra.mxu0 0
        %1265 = vmatprep.subr.bf16.mxu0 0
        %1266 = vmatpush1.bf16.xpose.msra.mxu0 0
        %1267 = vmatprep.subr.bf16.mxu0 0
        %1268 = vmatpush1.bf16.xpose.msra.mxu0 0
        %1269 = vmatprep.subr.bf16.mxu0 0
        %1270 = vmatpush1.bf16.xpose.msra.mxu0 0
        %1271 = vmatprep.subr.bf16.mxu0 0
        %1272 = vmatpush1.bf16.xpose.msra.mxu0 0
        %1273 = vmatprep.subr.bf16.mxu0 0
        %1274 = vmatpush1.bf16.xpose.msra.mxu0 0
        %1275 = vmatprep.subr.bf16.mxu0 0
        %1276 = vmatpush1.bf16.xpose.msra.mxu0 0
        %1277 = vmatprep.subr.bf16.mxu0 0
        %1278 = vmatpush1.bf16.xpose.msra.mxu0 0
        %1279 = vmatprep.subr.bf16.mxu0 0
        %1280 = vmatpush1.bf16.xpose.msra.mxu0 0
        %1281 = vmatprep.mubr.bf16.mxu0 0
        %1282 = vmatmul.mubr.bf16.gmra.mrb[0].mxu0 %v1244
        %v1283 = vpop.f32.mrb[0].mxu0
        %v1284 = vadd.f32 0.0, %v1283
        %v1285 = vpop.f32.mrb[0].mxu0
        %v1286 = vpop.f32.mrb[0].mxu0
        %v1287 = vpop.f32.mrb[0].mxu0
        %1288 = vdwg.mxu0
        %v1289 = vcombine.low %v962, %v1054
        %v1291 = vunpack.c.l.s4 1983009808
        %v1292 = vunpack.c.0.s8 %v1291
        %v1293 = vlaneseq
        %v1294 = vshrl.u32 %v1293, 7
        %v1295 = vsub.s32 %v1292, %v1294
        %v1296 = vrot.slane %v1289, %v1295
        %v1297 = vcombine.low %v1008, %v1100
        %v1299 = vunpack.c.l.s4 1983009808
        %v1300 = vunpack.c.0.s8 %v1299
        %v1301 = vlaneseq
        %v1302 = vshrl.u32 %v1301, 7
        %v1303 = vsub.s32 %v1300, %v1302
        %v1304 = vrot.slane %v1297, %v1303
        %v1305 = vcombine.low %v1146, %v1238
        %v1307 = vunpack.c.l.s4 1983009808
        %v1308 = vunpack.c.0.s8 %v1307
        %v1309 = vlaneseq
        %v1310 = vshrl.u32 %v1309, 7
        %v1311 = vsub.s32 %v1308, %v1310
        %v1312 = vrot.slane %v1305, %v1311
        %v1313 = vcombine.low %v1192, %v1284
        %v1315 = vunpack.c.l.s4 1983009808
        %v1316 = vunpack.c.0.s8 %v1315
        %v1317 = vlaneseq
        %v1318 = vshrl.u32 %v1317, 7
        %v1319 = vsub.s32 %v1316, %v1318
        %v1320 = vrot.slane %v1313, %v1319
        %v1321 = vcombine.low %v1296, %v1304
        %v1322 = vcombine.high %v1296, %v1304
        %v1324 = vunpack.c.l.s4 1934713408
        %v1325 = vunpack.c.0.s8 %v1324
        %v1326 = vlaneseq
        %v1327 = vshrl.u32 %v1326, 7
        %v1328 = vsub.s32 %v1325, %v1327
        %v1329 = vrot.slane %v1321, %v1328
        %v1331 = vunpack.c.l.s4 1934713408
        %v1332 = vunpack.c.0.s8 %v1331
        %v1333 = vlaneseq
        %v1334 = vshrl.u32 %v1333, 7
        %v1335 = vsub.s32 %v1332, %v1334
        %v1336 = vrot.slane %v1322, %v1335
        %v1337 = vcombine.low %v1312, %v1320
        %v1338 = vcombine.high %v1312, %v1320
        %v1340 = vunpack.c.l.s4 1934713408
        %v1341 = vunpack.c.0.s8 %v1340
        %v1342 = vlaneseq
        %v1343 = vshrl.u32 %v1342, 7
        %v1344 = vsub.s32 %v1341, %v1343
        %v1345 = vrot.slane %v1337, %v1344
        %v1347 = vunpack.c.l.s4 1934713408
        %v1348 = vunpack.c.0.s8 %v1347
        %v1349 = vlaneseq
        %v1350 = vshrl.u32 %v1349, 7
        %v1351 = vsub.s32 %v1348, %v1350
        %v1352 = vrot.slane %v1338, %v1351
        %v1353 = vcombine.low %v1329, %v1345
        %v1354 = vcombine.high %v1329, %v1345
        %v1355 = vcombine.low %v1336, %v1352
        %v1356 = vcombine.high %v1336, %v1352
        %v1358 = vsel %vm920, %v878, 0
        %v1361 = vsel %vm920, %v890, 0
        %1363 = vmatprep.subr.bf16.mxu0 0
        %1364 = vmatpush1.bf16.xpose.msra.mxu0 %v1361
        %1365 = vmatprep.subr.bf16.mxu0 0
        %1366 = vmatpush1.bf16.xpose.msra.mxu0 0
        %1367 = vmatprep.subr.bf16.mxu0 0
        %1368 = vmatpush1.bf16.xpose.msra.mxu0 0
        %1369 = vmatprep.subr.bf16.mxu0 0
        %1370 = vmatpush1.bf16.xpose.msra.mxu0 0
        %1371 = vmatprep.subr.bf16.mxu0 0
        %1372 = vmatpush1.bf16.xpose.msra.mxu0 0
        %1373 = vmatprep.subr.bf16.mxu0 0
        %1374 = vmatpush1.bf16.xpose.msra.mxu0 0
        %1375 = vmatprep.subr.bf16.mxu0 0
        %1376 = vmatpush1.bf16.xpose.msra.mxu0 0
        %1377 = vmatprep.subr.bf16.mxu0 0
        %1378 = vmatpush1.bf16.xpose.msra.mxu0 0
        %1379 = vmatprep.subr.bf16.mxu0 0
        %1380 = vmatpush1.bf16.xpose.msra.mxu0 0
        %1381 = vmatprep.subr.bf16.mxu0 0
        %1382 = vmatpush1.bf16.xpose.msra.mxu0 0
        %1383 = vmatprep.subr.bf16.mxu0 0
        %1384 = vmatpush1.bf16.xpose.msra.mxu0 0
        %1385 = vmatprep.subr.bf16.mxu0 0
        %1386 = vmatpush1.bf16.xpose.msra.mxu0 0
        %1387 = vmatprep.subr.bf16.mxu0 0
        %1388 = vmatpush1.bf16.xpose.msra.mxu0 0
        %1389 = vmatprep.subr.bf16.mxu0 0
        %1390 = vmatpush1.bf16.xpose.msra.mxu0 0
        %1391 = vmatprep.subr.bf16.mxu0 0
        %1392 = vmatpush1.bf16.xpose.msra.mxu0 0
        %1393 = vmatprep.subr.bf16.mxu0 0
        %1394 = vmatpush1.bf16.xpose.msra.mxu0 0
        %1395 = vmatprep.mubr.bf16.mxu0 0
        %1396 = vmatmul.mubr.bf16.gmra.mrb[0].mxu0 %v1358
        %v1397 = vpop.f32.mrb[0].mxu0
        %v1398 = vadd.f32 %v1353, %v1397
        %v1399 = vpop.f32.mrb[0].mxu0
        %v1400 = vpop.f32.mrb[0].mxu0
        %v1401 = vpop.f32.mrb[0].mxu0
        %1402 = vdwg.mxu0
        %v1404 = vsel %vm920, %v881, 0
        %v1407 = vsel %vm920, %v893, 0
        %1409 = vmatprep.subr.bf16.mxu0 0
        %1410 = vmatpush1.bf16.xpose.msra.mxu0 %v1407
        %1411 = vmatprep.subr.bf16.mxu0 0
        %1412 = vmatpush1.bf16.xpose.msra.mxu0 0
        %1413 = vmatprep.subr.bf16.mxu0 0
        %1414 = vmatpush1.bf16.xpose.msra.mxu0 0
        %1415 = vmatprep.subr.bf16.mxu0 0
        %1416 = vmatpush1.bf16.xpose.msra.mxu0 0
        %1417 = vmatprep.subr.bf16.mxu0 0
        %1418 = vmatpush1.bf16.xpose.msra.mxu0 0
        %1419 = vmatprep.subr.bf16.mxu0 0
        %1420 = vmatpush1.bf16.xpose.msra.mxu0 0
        %1421 = vmatprep.subr.bf16.mxu0 0
        %1422 = vmatpush1.bf16.xpose.msra.mxu0 0
        %1423 = vmatprep.subr.bf16.mxu0 0
        %1424 = vmatpush1.bf16.xpose.msra.mxu0 0
        %1425 = vmatprep.subr.bf16.mxu0 0
        %1426 = vmatpush1.bf16.xpose.msra.mxu0 0
        %1427 = vmatprep.subr.bf16.mxu0 0
        %1428 = vmatpush1.bf16.xpose.msra.mxu0 0
        %1429 = vmatprep.subr.bf16.mxu0 0
        %1430 = vmatpush1.bf16.xpose.msra.mxu0 0
        %1431 = vmatprep.subr.bf16.mxu0 0
        %1432 = vmatpush1.bf16.xpose.msra.mxu0 0
        %1433 = vmatprep.subr.bf16.mxu0 0
        %1434 = vmatpush1.bf16.xpose.msra.mxu0 0
        %1435 = vmatprep.subr.bf16.mxu0 0
        %1436 = vmatpush1.bf16.xpose.msra.mxu0 0
        %1437 = vmatprep.subr.bf16.mxu0 0
        %1438 = vmatpush1.bf16.xpose.msra.mxu0 0
        %1439 = vmatprep.subr.bf16.mxu0 0
        %1440 = vmatpush1.bf16.xpose.msra.mxu0 0
        %1441 = vmatprep.mubr.bf16.mxu0 0
        %1442 = vmatmul.mubr.bf16.gmra.mrb[0].mxu0 %v1404
        %v1443 = vpop.f32.mrb[0].mxu0
        %v1444 = vadd.f32 %v1354, %v1443
        %v1445 = vpop.f32.mrb[0].mxu0
        %v1446 = vpop.f32.mrb[0].mxu0
        %v1447 = vpop.f32.mrb[0].mxu0
        %1448 = vdwg.mxu0
        %v1450 = vsel %vm920, %v884, 0
        %v1453 = vsel %vm920, %v896, 0
        %1455 = vmatprep.subr.bf16.mxu0 0
        %1456 = vmatpush1.bf16.xpose.msra.mxu0 %v1453
        %1457 = vmatprep.subr.bf16.mxu0 0
        %1458 = vmatpush1.bf16.xpose.msra.mxu0 0
        %1459 = vmatprep.subr.bf16.mxu0 0
        %1460 = vmatpush1.bf16.xpose.msra.mxu0 0
        %1461 = vmatprep.subr.bf16.mxu0 0
        %1462 = vmatpush1.bf16.xpose.msra.mxu0 0
        %1463 = vmatprep.subr.bf16.mxu0 0
        %1464 = vmatpush1.bf16.xpose.msra.mxu0 0
        %1465 = vmatprep.subr.bf16.mxu0 0
        %1466 = vmatpush1.bf16.xpose.msra.mxu0 0
        %1467 = vmatprep.subr.bf16.mxu0 0
        %1468 = vmatpush1.bf16.xpose.msra.mxu0 0
        %1469 = vmatprep.subr.bf16.mxu0 0
        %1470 = vmatpush1.bf16.xpose.msra.mxu0 0
        %1471 = vmatprep.subr.bf16.mxu0 0
        %1472 = vmatpush1.bf16.xpose.msra.mxu0 0
        %1473 = vmatprep.subr.bf16.mxu0 0
        %1474 = vmatpush1.bf16.xpose.msra.mxu0 0
        %1475 = vmatprep.subr.bf16.mxu0 0
        %1476 = vmatpush1.bf16.xpose.msra.mxu0 0
        %1477 = vmatprep.subr.bf16.mxu0 0
        %1478 = vmatpush1.bf16.xpose.msra.mxu0 0
        %1479 = vmatprep.subr.bf16.mxu0 0
        %1480 = vmatpush1.bf16.xpose.msra.mxu0 0
        %1481 = vmatprep.subr.bf16.mxu0 0
        %1482 = vmatpush1.bf16.xpose.msra.mxu0 0
        %1483 = vmatprep.subr.bf16.mxu0 0
        %1484 = vmatpush1.bf16.xpose.msra.mxu0 0
        %1485 = vmatprep.subr.bf16.mxu0 0
        %1486 = vmatpush1.bf16.xpose.msra.mxu0 0
        %1487 = vmatprep.mubr.bf16.mxu0 0
        %1488 = vmatmul.mubr.bf16.gmra.mrb[0].mxu0 %v1450
        %v1489 = vpop.f32.mrb[0].mxu0
        %v1490 = vadd.f32 %v1355, %v1489
        %v1491 = vpop.f32.mrb[0].mxu0
        %v1492 = vpop.f32.mrb[0].mxu0
        %v1493 = vpop.f32.mrb[0].mxu0
        %1494 = vdwg.mxu0
        %v1496 = vsel %vm920, %v887, 0
        %v1499 = vsel %vm920, %v899, 0
        %1501 = vmatprep.subr.bf16.mxu0 0
        %1502 = vmatpush1.bf16.xpose.msra.mxu0 %v1499
        %1503 = vmatprep.subr.bf16.mxu0 0
        %1504 = vmatpush1.bf16.xpose.msra.mxu0 0
        %1505 = vmatprep.subr.bf16.mxu0 0
        %1506 = vmatpush1.bf16.xpose.msra.mxu0 0
        %1507 = vmatprep.subr.bf16.mxu0 0
        %1508 = vmatpush1.bf16.xpose.msra.mxu0 0
        %1509 = vmatprep.subr.bf16.mxu0 0
        %1510 = vmatpush1.bf16.xpose.msra.mxu0 0
        %1511 = vmatprep.subr.bf16.mxu0 0
        %1512 = vmatpush1.bf16.xpose.msra.mxu0 0
        %1513 = vmatprep.subr.bf16.mxu0 0
        %1514 = vmatpush1.bf16.xpose.msra.mxu0 0
        %1515 = vmatprep.subr.bf16.mxu0 0
        %1516 = vmatpush1.bf16.xpose.msra.mxu0 0
        %1517 = vmatprep.subr.bf16.mxu0 0
        %1518 = vmatpush1.bf16.xpose.msra.mxu0 0
        %1519 = vmatprep.subr.bf16.mxu0 0
        %1520 = vmatpush1.bf16.xpose.msra.mxu0 0
        %1521 = vmatprep.subr.bf16.mxu0 0
        %1522 = vmatpush1.bf16.xpose.msra.mxu0 0
        %1523 = vmatprep.subr.bf16.mxu0 0
        %1524 = vmatpush1.bf16.xpose.msra.mxu0 0
        %1525 = vmatprep.subr.bf16.mxu0 0
        %1526 = vmatpush1.bf16.xpose.msra.mxu0 0
        %1527 = vmatprep.subr.bf16.mxu0 0
        %1528 = vmatpush1.bf16.xpose.msra.mxu0 0
        %1529 = vmatprep.subr.bf16.mxu0 0
        %1530 = vmatpush1.bf16.xpose.msra.mxu0 0
        %1531 = vmatprep.subr.bf16.mxu0 0
        %1532 = vmatpush1.bf16.xpose.msra.mxu0 0
        %1533 = vmatprep.mubr.bf16.mxu0 0
        %1534 = vmatmul.mubr.bf16.gmra.mrb[0].mxu0 %v1496
        %v1535 = vpop.f32.mrb[0].mxu0
        %v1536 = vadd.f32 %v1356, %v1535
        %v1537 = vpop.f32.mrb[0].mxu0
        %v1538 = vpop.f32.mrb[0].mxu0
        %v1539 = vpop.f32.mrb[0].mxu0
        %1540 = vdwg.mxu0
        %v1541 = vsel %vm920, %v1398, -inf
        %1542 = vmax.xlane.f32.xlu0 %v1541
        %v1543 = vpop.xlane.xlu0 %1542
        %v1544 = vsel %vm920, %v1444, -inf
        %1545 = vmax.xlane.f32.xlu0 %v1544
        %v1546 = vpop.xlane.xlu0 %1545
        %v1547 = vsel %vm920, %v1490, -inf
        %1548 = vmax.xlane.f32.xlu0 %v1547
        %v1549 = vpop.xlane.xlu0 %1548
        %v1550 = vsel %vm920, %v1536, -inf
        %1551 = vmax.xlane.f32.xlu0 %v1550
        %v1552 = vpop.xlane.xlu0 %1551
        %v1553 = vsub.f32 %v1398, %v1543
        %v1554 = vsub.f32 %v1444, %v1546
        %v1555 = vsub.f32 %v1490, %v1549
        %v1556 = vsub.f32 %v1536, %v1552
        %v1557 = vmul.f32 %v1553, 1.442695
        %v1558 = vpow.pop %v1557
        %v1559 = vmul.f32 %v1554, 1.442695
        %v1560 = vpow.pop %v1559
        %v1561 = vmul.f32 %v1555, 1.442695
        %v1562 = vpow.pop %v1561
        %v1563 = vmul.f32 %v1556, 1.442695
        %v1564 = vpow.pop %v1563
        %v1565 = vsel %vm920, %v1558, 0.0
        %1566 = vadd.xlane.f32.xlu0 %v1565
        %v1567 = vpop.xlane.xlu0 %1566
        %v1568 = vsel %vm920, %v1560, 0.0
        %1569 = vadd.xlane.f32.xlu0 %v1568
        %v1570 = vpop.xlane.xlu0 %1569
        %v1571 = vsel %vm920, %v1562, 0.0
        %1572 = vadd.xlane.f32.xlu0 %v1571
        %v1573 = vpop.xlane.xlu0 %1572
        %v1574 = vsel %vm920, %v1564, 0.0
        %1575 = vadd.xlane.f32.xlu0 %v1574
        %v1576 = vpop.xlane.xlu0 %1575
        %v1577 = vrcp.pop %v1567
        %v1578 = vrcp.pop %v1570
        %v1579 = vrcp.pop %v1573
        %v1580 = vrcp.pop %v1576
        %v1581 = vmul.f32 %v1558, %v1577
        %v1582 = vmul.f32 %v1560, %v1578
        %v1583 = vmul.f32 %v1562, %v1579
        %v1584 = vmul.f32 %v1564, %v1580
        %v1585 = vpack.c.bf16 %v1581, %v1581
        %v1586 = vpack.c.bf16 %v1582, %v1582
        %v1587 = vpack.c.bf16 %v1583, %v1583
        %v1588 = vpack.c.bf16 %v1584, %v1584
        %v1590 = vsel %vm920, %v1585, 0
        %vm1592 = vcmask 1043456
        %v1594 = vsel %vm1592, %v902, 0
        %1596 = vmatprep.subr.bf16.mxu0 0
        %1597 = vmatpush1.bf16.msra.mxu0 %v1594
        %1598 = vmatprep.subr.bf16.mxu0 0
        %1599 = vmatpush1.bf16.msra.mxu0 0
        %1600 = vmatprep.subr.bf16.mxu0 0
        %1601 = vmatpush1.bf16.msra.mxu0 0
        %1602 = vmatprep.subr.bf16.mxu0 0
        %1603 = vmatpush1.bf16.msra.mxu0 0
        %1604 = vmatprep.subr.bf16.mxu0 0
        %1605 = vmatpush1.bf16.msra.mxu0 0
        %1606 = vmatprep.subr.bf16.mxu0 0
        %1607 = vmatpush1.bf16.msra.mxu0 0
        %1608 = vmatprep.subr.bf16.mxu0 0
        %1609 = vmatpush1.bf16.msra.mxu0 0
        %1610 = vmatprep.subr.bf16.mxu0 0
        %1611 = vmatpush1.bf16.msra.mxu0 0
        %1612 = vmatprep.subr.bf16.mxu0 0
        %1613 = vmatpush1.bf16.msra.mxu0 0
        %1614 = vmatprep.subr.bf16.mxu0 0
        %1615 = vmatpush1.bf16.msra.mxu0 0
        %1616 = vmatprep.subr.bf16.mxu0 0
        %1617 = vmatpush1.bf16.msra.mxu0 0
        %1618 = vmatprep.subr.bf16.mxu0 0
        %1619 = vmatpush1.bf16.msra.mxu0 0
        %1620 = vmatprep.subr.bf16.mxu0 0
        %1621 = vmatpush1.bf16.msra.mxu0 0
        %1622 = vmatprep.subr.bf16.mxu0 0
        %1623 = vmatpush1.bf16.msra.mxu0 0
        %1624 = vmatprep.subr.bf16.mxu0 0
        %1625 = vmatpush1.bf16.msra.mxu0 0
        %1626 = vmatprep.subr.bf16.mxu0 0
        %1627 = vmatpush1.bf16.msra.mxu0 0
        %1628 = vmatprep.mubr.bf16.mxu0 0
        %1629 = vmatmul.mubr.bf16.gmra.mrb[0].mxu0 %v1590
        %v1630 = vpop.f32.mrb[0].mxu0
        %v1631 = vadd.f32 0.0, %v1630
        %v1632 = vpop.f32.mrb[0].mxu0
        %v1633 = vpop.f32.mrb[0].mxu0
        %v1634 = vpop.f32.mrb[0].mxu0
        %1635 = vdwg.mxu0
        %v1637 = vsel %vm920, %v1586, 0
        %v1640 = vsel %vm1592, %v905, 0
        %1642 = vmatprep.subr.bf16.mxu0 0
        %1643 = vmatpush1.bf16.msra.mxu0 %v1640
        %1644 = vmatprep.subr.bf16.mxu0 0
        %1645 = vmatpush1.bf16.msra.mxu0 0
        %1646 = vmatprep.subr.bf16.mxu0 0
        %1647 = vmatpush1.bf16.msra.mxu0 0
        %1648 = vmatprep.subr.bf16.mxu0 0
        %1649 = vmatpush1.bf16.msra.mxu0 0
        %1650 = vmatprep.subr.bf16.mxu0 0
        %1651 = vmatpush1.bf16.msra.mxu0 0
        %1652 = vmatprep.subr.bf16.mxu0 0
        %1653 = vmatpush1.bf16.msra.mxu0 0
        %1654 = vmatprep.subr.bf16.mxu0 0
        %1655 = vmatpush1.bf16.msra.mxu0 0
        %1656 = vmatprep.subr.bf16.mxu0 0
        %1657 = vmatpush1.bf16.msra.mxu0 0
        %1658 = vmatprep.subr.bf16.mxu0 0
        %1659 = vmatpush1.bf16.msra.mxu0 0
        %1660 = vmatprep.subr.bf16.mxu0 0
        %1661 = vmatpush1.bf16.msra.mxu0 0
        %1662 = vmatprep.subr.bf16.mxu0 0
        %1663 = vmatpush1.bf16.msra.mxu0 0
        %1664 = vmatprep.subr.bf16.mxu0 0
        %1665 = vmatpush1.bf16.msra.mxu0 0
        %1666 = vmatprep.subr.bf16.mxu0 0
        %1667 = vmatpush1.bf16.msra.mxu0 0
        %1668 = vmatprep.subr.bf16.mxu0 0
        %1669 = vmatpush1.bf16.msra.mxu0 0
        %1670 = vmatprep.subr.bf16.mxu0 0
        %1671 = vmatpush1.bf16.msra.mxu0 0
        %1672 = vmatprep.subr.bf16.mxu0 0
        %1673 = vmatpush1.bf16.msra.mxu0 0
        %1674 = vmatprep.mubr.bf16.mxu0 0
        %1675 = vmatmul.mubr.bf16.gmra.mrb[0].mxu0 %v1637
        %v1676 = vpop.f32.mrb[0].mxu0
        %v1677 = vadd.f32 0.0, %v1676
        %v1678 = vpop.f32.mrb[0].mxu0
        %v1679 = vpop.f32.mrb[0].mxu0
        %v1680 = vpop.f32.mrb[0].mxu0
        %1681 = vdwg.mxu0
        %v1683 = vsel %vm920, %v1587, 0
        %v1686 = vsel %vm1592, %v908, 0
        %1688 = vmatprep.subr.bf16.mxu0 0
        %1689 = vmatpush1.bf16.msra.mxu0 %v1686
        %1690 = vmatprep.subr.bf16.mxu0 0
        %1691 = vmatpush1.bf16.msra.mxu0 0
        %1692 = vmatprep.subr.bf16.mxu0 0
        %1693 = vmatpush1.bf16.msra.mxu0 0
        %1694 = vmatprep.subr.bf16.mxu0 0
        %1695 = vmatpush1.bf16.msra.mxu0 0
        %1696 = vmatprep.subr.bf16.mxu0 0
        %1697 = vmatpush1.bf16.msra.mxu0 0
        %1698 = vmatprep.subr.bf16.mxu0 0
        %1699 = vmatpush1.bf16.msra.mxu0 0
        %1700 = vmatprep.subr.bf16.mxu0 0
        %1701 = vmatpush1.bf16.msra.mxu0 0
        %1702 = vmatprep.subr.bf16.mxu0 0
        %1703 = vmatpush1.bf16.msra.mxu0 0
        %1704 = vmatprep.subr.bf16.mxu0 0
        %1705 = vmatpush1.bf16.msra.mxu0 0
        %1706 = vmatprep.subr.bf16.mxu0 0
        %1707 = vmatpush1.bf16.msra.mxu0 0
        %1708 = vmatprep.subr.bf16.mxu0 0
        %1709 = vmatpush1.bf16.msra.mxu0 0
        %1710 = vmatprep.subr.bf16.mxu0 0
        %1711 = vmatpush1.bf16.msra.mxu0 0
        %1712 = vmatprep.subr.bf16.mxu0 0
        %1713 = vmatpush1.bf16.msra.mxu0 0
        %1714 = vmatprep.subr.bf16.mxu0 0
        %1715 = vmatpush1.bf16.msra.mxu0 0
        %1716 = vmatprep.subr.bf16.mxu0 0
        %1717 = vmatpush1.bf16.msra.mxu0 0
        %1718 = vmatprep.subr.bf16.mxu0 0
        %1719 = vmatpush1.bf16.msra.mxu0 0
        %1720 = vmatprep.mubr.bf16.mxu0 0
        %1721 = vmatmul.mubr.bf16.gmra.mrb[0].mxu0 %v1683
        %v1722 = vpop.f32.mrb[0].mxu0
        %v1723 = vadd.f32 0.0, %v1722
        %v1724 = vpop.f32.mrb[0].mxu0
        %v1725 = vpop.f32.mrb[0].mxu0
        %v1726 = vpop.f32.mrb[0].mxu0
        %1727 = vdwg.mxu0
        %v1729 = vsel %vm920, %v1588, 0
        %v1732 = vsel %vm1592, %v911, 0
        %1734 = vmatprep.subr.bf16.mxu0 0
        %1735 = vmatpush1.bf16.msra.mxu0 %v1732
        %1736 = vmatprep.subr.bf16.mxu0 0
        %1737 = vmatpush1.bf16.msra.mxu0 0
        %1738 = vmatprep.subr.bf16.mxu0 0
        %1739 = vmatpush1.bf16.msra.mxu0 0
        %1740 = vmatprep.subr.bf16.mxu0 0
        %1741 = vmatpush1.bf16.msra.mxu0 0
        %1742 = vmatprep.subr.bf16.mxu0 0
        %1743 = vmatpush1.bf16.msra.mxu0 0
        %1744 = vmatprep.subr.bf16.mxu0 0
        %1745 = vmatpush1.bf16.msra.mxu0 0
        %1746 = vmatprep.subr.bf16.mxu0 0
        %1747 = vmatpush1.bf16.msra.mxu0 0
        %1748 = vmatprep.subr.bf16.mxu0 0
        %1749 = vmatpush1.bf16.msra.mxu0 0
        %1750 = vmatprep.subr.bf16.mxu0 0
        %1751 = vmatpush1.bf16.msra.mxu0 0
        %1752 = vmatprep.subr.bf16.mxu0 0
        %1753 = vmatpush1.bf16.msra.mxu0 0
        %1754 = vmatprep.subr.bf16.mxu0 0
        %1755 = vmatpush1.bf16.msra.mxu0 0
        %1756 = vmatprep.subr.bf16.mxu0 0
        %1757 = vmatpush1.bf16.msra.mxu0 0
        %1758 = vmatprep.subr.bf16.mxu0 0
        %1759 = vmatpush1.bf16.msra.mxu0 0
        %1760 = vmatprep.subr.bf16.mxu0 0
        %1761 = vmatpush1.bf16.msra.mxu0 0
        %1762 = vmatprep.subr.bf16.mxu0 0
        %1763 = vmatpush1.bf16.msra.mxu0 0
        %1764 = vmatprep.subr.bf16.mxu0 0
        %1765 = vmatpush1.bf16.msra.mxu0 0
        %1766 = vmatprep.mubr.bf16.mxu0 0
        %1767 = vmatmul.mubr.bf16.gmra.mrb[0].mxu0 %v1729
        %v1768 = vpop.f32.mrb[0].mxu0
        %v1769 = vadd.f32 0.0, %v1768
        %v1770 = vpop.f32.mrb[0].mxu0
        %v1771 = vpop.f32.mrb[0].mxu0
        %v1772 = vpop.f32.mrb[0].mxu0
        %1773 = vdwg.mxu0
        %v1774 = vpack.c.bf16 %v1631, %v1631
        %v1776 = vunpack.c.l.s4 1983009808
        %v1777 = vunpack.c.0.s8 %v1776
        %v1778 = vlaneseq
        %v1779 = vshrl.u32 %v1778, 7
        %v1780 = vsub.s32 %v1777, %v1779
        %v1781 = vrot.slane %v1774, %v1780
        %v1782 = vpack.c.bf16 %v1723, %v1723
        %v1784 = vunpack.c.l.s4 1983009808
        %v1785 = vunpack.c.0.s8 %v1784
        %v1786 = vlaneseq
        %v1787 = vshrl.u32 %v1786, 7
        %v1788 = vsub.s32 %v1785, %v1787
        %v1789 = vrot.slane %v1782, %v1788
        %v1790 = vcombine.low %v1781, %v1789
        %v1791 = vcombine.high %v1781, %v1789
        %v1793 = vunpack.c.l.s4 1934713408
        %v1794 = vunpack.c.0.s8 %v1793
        %v1795 = vlaneseq
        %v1796 = vshrl.u32 %v1795, 7
        %v1797 = vsub.s32 %v1794, %v1796
        %v1798 = vrot.slane %v1790, %v1797
        %v1800 = vunpack.c.l.s4 1934713408
        %v1801 = vunpack.c.0.s8 %v1800
        %v1802 = vlaneseq
        %v1803 = vshrl.u32 %v1802, 7
        %v1804 = vsub.s32 %v1801, %v1803
        %v1805 = vrot.slane %v1791, %v1804
        %v1806 = vcombine.high %v1798, 0
        %v1807 = vcombine.high %v1805, 0
        %v1808 = vpack.c.bf16 %v1677, %v1677
        %v1810 = vunpack.c.l.s4 1983009808
        %v1811 = vunpack.c.0.s8 %v1810
        %v1812 = vlaneseq
        %v1813 = vshrl.u32 %v1812, 7
        %v1814 = vsub.s32 %v1811, %v1813
        %v1815 = vrot.slane %v1808, %v1814
        %v1816 = vpack.c.bf16 %v1769, %v1769
        %v1818 = vunpack.c.l.s4 1983009808
        %v1819 = vunpack.c.0.s8 %v1818
        %v1820 = vlaneseq
        %v1821 = vshrl.u32 %v1820, 7
        %v1822 = vsub.s32 %v1819, %v1821
        %v1823 = vrot.slane %v1816, %v1822
        %v1824 = vcombine.low %v1815, %v1823
        %v1825 = vcombine.high %v1815, %v1823
        %v1827 = vunpack.c.l.s4 1934713408
        %v1828 = vunpack.c.0.s8 %v1827
        %v1829 = vlaneseq
        %v1830 = vshrl.u32 %v1829, 7
        %v1831 = vsub.s32 %v1828, %v1830
        %v1832 = vrot.slane %v1824, %v1831
        %v1834 = vunpack.c.l.s4 1934713408
        %v1835 = vunpack.c.0.s8 %v1834
        %v1836 = vlaneseq
        %v1837 = vshrl.u32 %v1836, 7
        %v1838 = vsub.s32 %v1835, %v1837
        %v1839 = vrot.slane %v1825, %v1838
        %v1840 = vcombine.high %v1832, 0
        %v1841 = vcombine.high %v1839, 0
        %v1844 = vpack.i.b16 %v1832, %v1798
        %v1846 = vshrl.u32 %v1798, 16
        %v1847 = vshrl.u32 %v1832, 16
        %v1848 = vpack.i.b16 %v1847, %v1846
        %v1852 = vpack.i.b16 %v1840, %v1806
        %v1854 = vshrl.u32 %v1806, 16
        %v1855 = vshrl.u32 %v1840, 16
        %v1856 = vpack.i.b16 %v1855, %v1854
        %v1860 = vpack.i.b16 %v1839, %v1805
        %v1862 = vshrl.u32 %v1805, 16
        %v1863 = vshrl.u32 %v1839, 16
        %v1864 = vpack.i.b16 %v1863, %v1862
        %v1868 = vpack.i.b16 %v1841, %v1807
        %v1870 = vshrl.u32 %v1807, 16
        %v1871 = vshrl.u32 %v1841, 16
        %v1872 = vpack.i.b16 %v1871, %v1870
        %v1874 = vcombine.low %v1844, %v1860
        %v1876 = vunpack.c.l.s4 1983009808
        %v1877 = vunpack.c.0.s8 %v1876
        %v1878 = vlaneseq
        %v1879 = vshrl.u32 %v1878, 7
        %v1880 = vsub.s32 %v1877, %v1879
        %v1881 = vrot.slane %v1874, %v1880
        %v1882 = vcombine.low %v1852, %v1868
        %v1884 = vunpack.c.l.s4 1983009808
        %v1885 = vunpack.c.0.s8 %v1884
        %v1886 = vlaneseq
        %v1887 = vshrl.u32 %v1886, 7
        %v1888 = vsub.s32 %v1885, %v1887
        %v1889 = vrot.slane %v1882, %v1888
        %v1890 = vcombine.low %v1881, %v1889
        %v1892 = vunpack.c.l.s4 1934713408
        %v1893 = vunpack.c.0.s8 %v1892
        %v1894 = vlaneseq
        %v1895 = vshrl.u32 %v1894, 7
        %v1896 = vsub.s32 %v1893, %v1895
        %v1897 = vrot.slane %v1890, %v1896
        %v1898 = vcombine.high %v1897, 0
        %v1899 = vcombine.low %v1848, %v1864
        %v1901 = vunpack.c.l.s4 1983009808
        %v1902 = vunpack.c.0.s8 %v1901
        %v1903 = vlaneseq
        %v1904 = vshrl.u32 %v1903, 7
        %v1905 = vsub.s32 %v1902, %v1904
        %v1906 = vrot.slane %v1899, %v1905
        %v1907 = vcombine.low %v1856, %v1872
        %v1909 = vunpack.c.l.s4 1983009808
        %v1910 = vunpack.c.0.s8 %v1909
        %v1911 = vlaneseq
        %v1912 = vshrl.u32 %v1911, 7
        %v1913 = vsub.s32 %v1910, %v1912
        %v1914 = vrot.slane %v1907, %v1913
        %v1915 = vcombine.low %v1906, %v1914
        %v1917 = vunpack.c.l.s4 1934713408
        %v1918 = vunpack.c.0.s8 %v1917
        %v1919 = vlaneseq
        %v1920 = vshrl.u32 %v1919, 7
        %v1921 = vsub.s32 %v1918, %v1920
        %v1922 = vrot.slane %v1915, %v1921
        %v1923 = vcombine.high %v1922, 0
        %v1926 = vpack.i.b16 %v1922, %v1897
        %v1927 = vshrl.u32 %v1897, 16
        %v1928 = vshrl.u32 %v1922, 16
        %v1929 = vpack.i.b16 %v1928, %v1927
        %v1932 = vpack.i.b16 %v1923, %v1898
        %v1933 = vshrl.u32 %v1898, 16
        %v1934 = vshrl.u32 %v1923, 16
        %v1935 = vpack.i.b16 %v1934, %v1933
        %1936 = vrot.lane.b32.xlu0 %v1929, 8
        %v1937 = vpop.permute.xlu0 %1936
        %1938 = vrot.lane.b32.xlu0 %v1932, 16
        %v1939 = vpop.permute.xlu0 %1938
        %1940 = vrot.lane.b32.xlu0 %v1935, 24
        %v1941 = vpop.permute.xlu0 %1940
        %v1944 = vsel %vm920, %v1926, %v1937
        %vm1945 = vcmask 130048
        %v1947 = vsel %vm1945, %v1944, %v1939
        %vm1948 = vcmask 195584
        %v1950 = vsel %vm1948, %v1947, %v1941
        %v1951 = vld [vmem:[%s446] sm:$0xf]
        %v1952 = vld [vmem:[%s446 + $0x4] sm:$0xf]
        %v1953 = vld [vmem:[%s446 + $0x8] sm:$0xf]
        %v1954 = vld [vmem:[%s446 + $0xc] sm:$0xf]
        %v1959 = vunpack.c.l.b16 %v1951
        %v1960 = vunpack.c.l.b16 %v1952
        %v1961 = vunpack.c.l.b16 %v1953
        %v1962 = vunpack.c.l.b16 %v1954
        %v1963 = vpack.c.b16 %v1960, %v1959
        %v1964 = vpack.c.b16 %v1962, %v1961
        %v1967 = vsel %vm474, %v1950, 0
        %1969 = vmatprep.subr.bf16.mxu0 0
        %1970 = vmatpush1.bf16.msra.mxu0 %v1963
        %1971 = vmatprep.subr.bf16.mxu0 0
        %1972 = vmatpush1.bf16.msra.mxu0 %v1964
        %1973 = vmatprep.subr.bf16.mxu0 0
        %1974 = vmatpush1.bf16.msra.mxu0 0
        %1975 = vmatprep.subr.bf16.mxu0 0
        %1976 = vmatpush1.bf16.msra.mxu0 0
        %1977 = vmatprep.subr.bf16.mxu0 0
        %1978 = vmatpush1.bf16.msra.mxu0 0
        %1979 = vmatprep.subr.bf16.mxu0 0
        %1980 = vmatpush1.bf16.msra.mxu0 0
        %1981 = vmatprep.subr.bf16.mxu0 0
        %1982 = vmatpush1.bf16.msra.mxu0 0
        %1983 = vmatprep.subr.bf16.mxu0 0
        %1984 = vmatpush1.bf16.msra.mxu0 0
        %1985 = vmatprep.subr.bf16.mxu0 0
        %1986 = vmatpush1.bf16.msra.mxu0 0
        %1987 = vmatprep.subr.bf16.mxu0 0
        %1988 = vmatpush1.bf16.msra.mxu0 0
        %1989 = vmatprep.subr.bf16.mxu0 0
        %1990 = vmatpush1.bf16.msra.mxu0 0
        %1991 = vmatprep.subr.bf16.mxu0 0
        %1992 = vmatpush1.bf16.msra.mxu0 0
        %1993 = vmatprep.subr.bf16.mxu0 0
        %1994 = vmatpush1.bf16.msra.mxu0 0
        %1995 = vmatprep.subr.bf16.mxu0 0
        %1996 = vmatpush1.bf16.msra.mxu0 0
        %1997 = vmatprep.subr.bf16.mxu0 0
        %1998 = vmatpush1.bf16.msra.mxu0 0
        %1999 = vmatprep.subr.bf16.mxu0 0
        %2000 = vmatpush1.bf16.msra.mxu0 0
        %2001 = vmatprep.mubr.bf16.mxu0 0
        %2002 = vmatmul.mubr.bf16.gmra.mrb[0].mxu0 %v1967
        %v2003 = vpop.f32.mrb[0].mxu0
        %v2004 = vadd.f32 0.0, %v2003
        %v2005 = vpop.f32.mrb[0].mxu0
        %v2006 = vpop.f32.mrb[0].mxu0
        %v2007 = vpop.f32.mrb[0].mxu0
        %2008 = vdwg.mxu0
        %v2009 = vadd.f32 %v472, %v2004
        %v2010 = vlaneseq
        %v2011 = vshrl.u32 %v2010, 7
        %v2012 = vsub.s32 6, %v2011
        %v2013 = vrot.slane %v473, %v2012
        %v2014 = vadd.f32 %v2009, %v2013
        %v2015 = vsel %vm474, %v2014, 0.0
        %2016 = vadd.xlane.f32.xlu0 %v2015
        %v2017 = vpop.xlane.xlu0 %2016
        %v2018 = vmul.f32 %v2017, %v478
        %v2019 = vsub.f32 %v2014, %v2018
        %v2020 = vmul.f32 %v2019, %v2019
        %v2021 = vsel %vm474, %v2020, 0.0
        %2022 = vadd.xlane.f32.xlu0 %v2021
        %v2023 = vpop.xlane.xlu0 %2022
        %v2024 = vmul.f32 %v2023, %v478
        %v2025 = vadd.f32 %v2024, 1e-05
        %v2026 = vrsqrt.pop %v2025
        %v2027 = vmul.f32 %v2019, %v2026
        %v2028 = vlaneseq
        %v2029 = vshrl.u32 %v2028, 7
        %v2030 = vsub.s32 2, %v2029
        %v2031 = vrot.slane %v473, %v2030
        %v2032 = vmul.f32 %v2027, %v2031
        %v2033 = vlaneseq
        %v2034 = vshrl.u32 %v2033, 7
        %v2035 = vsub.s32 3, %v2034
        %v2036 = vrot.slane %v473, %v2035
        %v2037 = vadd.f32 %v2032, %v2036
        %v2038 = vpack.c.bf16 %v2037, %v2037
        %v2039 = vld [vmem:[%s451] sm:$0xf]
        %v2040 = vld [vmem:[%s451 + $0x4] sm:$0xf]
        %v2041 = vld [vmem:[%s451 + $0x8] sm:$0xf]
        %v2042 = vld [vmem:[%s451 + $0xc] sm:$0xf]
        %v2043 = vld [vmem:[%s463] sm:$0x1]
        %v2045 = vlaneseq
        %v2046 = vshrl.u32 %v2045, 7
        %v2047 = vsub.s32 0, %v2046
        %v2048 = vrot.slane %v2043, %v2047
        %v2054 = vunpack.c.l.b16 %v2039
        %v2055 = vunpack.c.l.b16 %v2040
        %v2056 = vunpack.c.l.b16 %v2041
        %v2057 = vunpack.c.l.b16 %v2042
        %v2058 = vpack.c.b16 %v2055, %v2054
        %v2059 = vpack.c.b16 %v2057, %v2056
        %v2063 = vsel %vm474, %v2038, 0
        %2065 = vmatprep.subr.bf16.mxu0 0
        %2066 = vmatpush1.bf16.msra.mxu0 %v2058
        %2067 = vmatprep.subr.bf16.mxu0 0
        %2068 = vmatpush1.bf16.msra.mxu0 %v2059
        %2069 = vmatprep.subr.bf16.mxu0 0
        %2070 = vmatpush1.bf16.msra.mxu0 0
        %2071 = vmatprep.subr.bf16.mxu0 0
        %2072 = vmatpush1.bf16.msra.mxu0 0
        %2073 = vmatprep.subr.bf16.mxu0 0
        %2074 = vmatpush1.bf16.msra.mxu0 0
        %2075 = vmatprep.subr.bf16.mxu0 0
        %2076 = vmatpush1.bf16.msra.mxu0 0
        %2077 = vmatprep.subr.bf16.mxu0 0
        %2078 = vmatpush1.bf16.msra.mxu0 0
        %2079 = vmatprep.subr.bf16.mxu0 0
        %2080 = vmatpush1.bf16.msra.mxu0 0
        %2081 = vmatprep.subr.bf16.mxu0 0
        %2082 = vmatpush1.bf16.msra.mxu0 0
        %2083 = vmatprep.subr.bf16.mxu0 0
        %2084 = vmatpush1.bf16.msra.mxu0 0
        %2085 = vmatprep.subr.bf16.mxu0 0
        %2086 = vmatpush1.bf16.msra.mxu0 0
        %2087 = vmatprep.subr.bf16.mxu0 0
        %2088 = vmatpush1.bf16.msra.mxu0 0
        %2089 = vmatprep.subr.bf16.mxu0 0
        %2090 = vmatpush1.bf16.msra.mxu0 0
        %2091 = vmatprep.subr.bf16.mxu0 0
        %2092 = vmatpush1.bf16.msra.mxu0 0
        %2093 = vmatprep.subr.bf16.mxu0 0
        %2094 = vmatpush1.bf16.msra.mxu0 0
        %2095 = vmatprep.subr.bf16.mxu0 0
        %2096 = vmatpush1.bf16.msra.mxu0 0
        %2097 = vmatprep.mubr.bf16.mxu0 0
        %2098 = vmatmul.mubr.bf16.gmra.mrb[0].mxu0 %v2063
        %v2099 = vpop.f32.mrb[0].mxu0
        %v2100 = vadd.f32 %v2048, %v2099
        %v2101 = vpop.f32.mrb[0].mxu0
        %v2102 = vpop.f32.mrb[0].mxu0
        %v2103 = vpop.f32.mrb[0].mxu0
        %2104 = vdwg.mxu0
        %v2105 = vxor.u32 %v2100, 2147483648
        %v2106 = vmul.f32 %v2105, 1.442695
        %v2107 = vpow.pop %v2106
        %v2108 = vadd.f32 %v2107, 1.0
        %v2109 = vrcp.pop %v2108
        %v2110 = vmul.f32 1.0, %v2109
        %v2111 = vmul.f32 %v2100, %v2110
        %v2112 = vpack.c.bf16 %v2111, %v2111
        %v2113 = vld [vmem:[%s456] sm:$0xf]
        %v2114 = vld [vmem:[%s456 + $0x4] sm:$0xf]
        %v2115 = vld [vmem:[%s456 + $0x8] sm:$0xf]
        %v2116 = vld [vmem:[%s456 + $0xc] sm:$0xf]
        %v2117 = vld [vmem:[%s456 + $0x10] sm:$0xf]
        %v2118 = vld [vmem:[%s456 + $0x14] sm:$0xf]
        %v2119 = vld [vmem:[%s456 + $0x18] sm:$0xf]
        %v2120 = vld [vmem:[%s456 + $0x1c] sm:$0xf]
        %v2121 = vld [vmem:[%s456 + $0x20] sm:$0xf]
        %v2122 = vld [vmem:[%s456 + $0x24] sm:$0xf]
        %v2123 = vld [vmem:[%s456 + $0x28] sm:$0xf]
        %v2124 = vld [vmem:[%s456 + $0x2c] sm:$0xf]
        %v2125 = vld [vmem:[%s456 + $0x30] sm:$0xf]
        %v2126 = vld [vmem:[%s456 + $0x34] sm:$0xf]
        %v2127 = vld [vmem:[%s456 + $0x38] sm:$0xf]
        %v2128 = vld [vmem:[%s456 + $0x3c] sm:$0xf]
        %v2145 = vunpack.c.l.b16 %v2113
        %v2146 = vunpack.c.l.b16 %v2114
        %v2147 = vunpack.c.l.b16 %v2115
        %v2148 = vunpack.c.l.b16 %v2116
        %v2149 = vunpack.c.l.b16 %v2117
        %v2150 = vunpack.c.l.b16 %v2118
        %v2151 = vunpack.c.l.b16 %v2119
        %v2152 = vunpack.c.l.b16 %v2120
        %v2153 = vunpack.c.l.b16 %v2121
        %v2154 = vunpack.c.l.b16 %v2122
        %v2155 = vunpack.c.l.b16 %v2123
        %v2156 = vunpack.c.l.b16 %v2124
        %v2157 = vunpack.c.l.b16 %v2125
        %v2158 = vunpack.c.l.b16 %v2126
        %v2159 = vunpack.c.l.b16 %v2127
        %v2160 = vunpack.c.l.b16 %v2128
        %v2161 = vpack.c.b16 %v2146, %v2145
        %v2162 = vpack.c.b16 %v2148, %v2147
        %v2163 = vpack.c.b16 %v2150, %v2149
        %v2164 = vpack.c.b16 %v2152, %v2151
        %v2165 = vpack.c.b16 %v2154, %v2153
        %v2166 = vpack.c.b16 %v2156, %v2155
        %v2167 = vpack.c.b16 %v2158, %v2157
        %v2168 = vpack.c.b16 %v2160, %v2159
        %2177 = vmatprep.subr.bf16.mxu0 0
        %2178 = vmatpush1.bf16.msra.mxu0 %v2161
        %2179 = vmatprep.subr.bf16.mxu0 0
        %2180 = vmatpush1.bf16.msra.mxu0 %v2162
        %2181 = vmatprep.subr.bf16.mxu0 0
        %2182 = vmatpush1.bf16.msra.mxu0 %v2163
        %2183 = vmatprep.subr.bf16.mxu0 0
        %2184 = vmatpush1.bf16.msra.mxu0 %v2164
        %2185 = vmatprep.subr.bf16.mxu0 0
        %2186 = vmatpush1.bf16.msra.mxu0 %v2165
        %2187 = vmatprep.subr.bf16.mxu0 0
        %2188 = vmatpush1.bf16.msra.mxu0 %v2166
        %2189 = vmatprep.subr.bf16.mxu0 0
        %2190 = vmatpush1.bf16.msra.mxu0 %v2167
        %2191 = vmatprep.subr.bf16.mxu0 0
        %2192 = vmatpush1.bf16.msra.mxu0 %v2168
        %2193 = vmatprep.subr.bf16.mxu0 0
        %2194 = vmatpush1.bf16.msra.mxu0 0
        %2195 = vmatprep.subr.bf16.mxu0 0
        %2196 = vmatpush1.bf16.msra.mxu0 0
        %2197 = vmatprep.subr.bf16.mxu0 0
        %2198 = vmatpush1.bf16.msra.mxu0 0
        %2199 = vmatprep.subr.bf16.mxu0 0
        %2200 = vmatpush1.bf16.msra.mxu0 0
        %2201 = vmatprep.subr.bf16.mxu0 0
        %2202 = vmatpush1.bf16.msra.mxu0 0
        %2203 = vmatprep.subr.bf16.mxu0 0
        %2204 = vmatpush1.bf16.msra.mxu0 0
        %2205 = vmatprep.subr.bf16.mxu0 0
        %2206 = vmatpush1.bf16.msra.mxu0 0
        %2207 = vmatprep.subr.bf16.mxu0 0
        %2208 = vmatpush1.bf16.msra.mxu0 0
        %2209 = vmatprep.mubr.bf16.mxu0 0
        %2210 = vmatmul.mubr.bf16.gmra.mrb[0].mxu0 %v2112
        %v2211 = vpop.f32.mrb[0].mxu0
        %v2212 = vadd.f32 0.0, %v2211
        %v2213 = vpop.f32.mrb[0].mxu0
        %v2214 = vpop.f32.mrb[0].mxu0
        %v2215 = vpop.f32.mrb[0].mxu0
        %2216 = vdwg.mxu0
        %v2217 = vadd.f32 %v2014, %v2212
        %v2218 = vlaneseq
        %v2219 = vshrl.u32 %v2218, 7
        %v2220 = vsub.s32 7, %v2219
        %v2221 = vrot.slane %v473, %v2220
        %v2222 = vadd.f32 %v2217, %v2221
        %v2223 = vsel %vm474, %v2222, 0.0
        %2224 = vadd.xlane.f32.xlu0 %v2223
        %v2225 = vpop.xlane.xlu0 %2224
        %v2226 = vmul.f32 %v2225, %v478
        %v2227 = vsub.f32 %v2222, %v2226
        %v2228 = vmul.f32 %v2227, %v2227
        %v2229 = vsel %vm474, %v2228, 0.0
        %2230 = vadd.xlane.f32.xlu0 %v2229
        %v2231 = vpop.xlane.xlu0 %2230
        %v2232 = vmul.f32 %v2231, %v478
        %v2233 = vadd.f32 %v2232, 1e-05
        %v2234 = vrsqrt.pop %v2233
        %v2235 = vmul.f32 %v2227, %v2234
        %v2236 = vlaneseq
        %v2237 = vshrl.u32 %v2236, 7
        %v2238 = vsub.s32 4, %v2237
        %v2239 = vrot.slane %v473, %v2238
        %v2240 = vmul.f32 %v2235, %v2239
        %v2241 = vlaneseq
        %v2242 = vshrl.u32 %v2241, 7
        %v2243 = vsub.s32 5, %v2242
        %v2244 = vrot.slane %v473, %v2243
        %v2245 = vadd.f32 %v2240, %v2244
        %2246 = vst.msk [vmem:[#allocation2] sm:$0xff] %vm474, %v2245
        %p2247 = scmp.eq.s32.totalorder %s30, 1
        // Predicated region
        $region61: #{tpu_custom_call.1} parent=51 // pred_check
          %p2248 = pneg %p2247
        $region62: #{tpu_custom_call.1} parent=51 // pred_check_branch
          %2250 = sbr.rel (%p2248) target = $region64
        $region63: #{tpu_custom_call.1} parent=51 // pred_region
          %2251 = vst.msk [vmem:[%s431] sm:$0xff] %vm474, %v2245
        $region64: #{tpu_custom_call.1} parent=51 // pred_fallthru
          _
        %s2252 = sand.u32 %s253, 1
        %s2253 = scalar_lea.sflag [#allocation5], %s2252
        %s2254 = sand.u32 %s253, 1
        %s2255 = smul.addr %s2254, 8
        %s2256 = scalar_lea.vmem [#allocation6], %s2255
        // Predicated region
        $region65: #{tpu_custom_call.1} parent=51 // pred_check
          %p2257 = pneg %p263
        $region66: #{tpu_custom_call.1} parent=51 // pred_check_branch
          %2259 = sbr.rel (%p2257) target = $region68
        $region67: #{tpu_custom_call.1} parent=51 // pred_region
          %s2261 = ssub.s32 128, 128
          %2262 = vsyncadd %s2253, %s2261
          %s2263 = smul.addr %s29, 128
          %s2264 = scalar_lea.hbm %s8, %s2263
          %s2266 = sshll.u32 %s2256, 4
          %s2267 = int_to_ptr.vmem [resolvable:$true] %s2266
          %2269 = dma.vmem_to_hbm [thread:$0]  %s2267, 128, %s2264, %s2253
        $region68: #{tpu_custom_call.1} parent=51 // pred_fallthru
          _
      $region52: #{tpu_custom_call.1} parent=5 // pred_fallthru
        _
      %p2270 = scmp.le.s32.totalorder 2, %s20
      // Predicated region
      $region69: #{tpu_custom_call.1} parent=5 // pred_check
        %p2271 = pneg %p2270
      $region70: #{tpu_custom_call.1} parent=5 // pred_check_branch
        %2273 = sbr.rel (%p2271) target = $region72
      $region71: #{tpu_custom_call.1} parent=5 // pred_region
        %s2274 = ssub.s32 %s20, 2
        // Predicated region
        $region73: #{tpu_custom_call.1} parent=71 // pred_check
          %p2275 = pneg %p269
        $region74: #{tpu_custom_call.1} parent=71 // pred_check_branch
          %2277 = sbr.rel (%p2275) target = $region76
        $region75: #{tpu_custom_call.1} parent=71 // pred_region
          %s2278 = sand.u32 %s254, 1
          %s2279 = scalar_lea.sflag [#allocation5], %s2278
          %s2280 = sand.u32 %s254, 1
          %s2281 = smul.addr %s2280, 8
          %s2282 = scalar_lea.vmem [#allocation6], %s2281
          %2283 = dma.done %s2279, 128
        $region76: #{tpu_custom_call.1} parent=71 // pred_fallthru
          _
      $region72: #{tpu_custom_call.1} parent=5 // pred_fallthru
        _
    $region6: #{tpu_custom_call.1} parent=1 // loop_footer
      %s24 = sadd.s32 1, %s20
    $region7: #{tpu_custom_call.1} parent=1 // loop_footer_branch
      %19 = sbr.rel target = $region3
    $region8: #{tpu_custom_call.1} parent=1 // loop_exit
      _
    %2284 = vsyncpa [#allocation4], 1
    %s2285 = scalar_lea.sflag [#allocation4], 1
    %2286 = vsyncpa %s2285, 1
    %2287 = vsyncpa [#allocation5], 1
    %s2288 = scalar_lea.sflag [#allocation5], 1
    %2289 = vsyncpa %s2288, 1

</llo_original>
